<compile_context>
chip_gen: v7x
topology: tpu7x:2x2x1
jax: 0.10.0
libtpu: 0.0.40
codegen_flags: <defaults>
</compile_context>

<pallas_src>
import functools

import jax
import jax.numpy as jnp
from jax.experimental import pallas as pl
from jax.experimental.pallas import tpu as pltpu

EPS = 1e-5      # nn.InstanceNorm2d default eps (affine=False, biased variance)
KH = KW = 3


def _resnet_block_kernel(x_ref, w1_ref, w2_ref, o_ref, *, H, W):
    C = x_ref.shape[1]
    HW = H * W

    # Flat-index edge masks for the reflection fixups (built once per grid
    # step, shared by both conv stages).
    p = jax.lax.broadcasted_iota(jnp.int32, (1, HW), 1)
    jj = jax.lax.rem(p, W)
    at_j0 = jj == 0              # first column of each row
    at_jL = jj == W - 1          # last column of each row
    at_i0 = p < W                # first row
    at_iL = p >= HW - W          # last row

    def rot(a, s):
        # Circular lane shift on the flattened (C, H*W) slab (XLU).
        return pltpu.roll(a, s % HW, axis=1)

    def shift_w(a, d):
        """value at column reflect(j + d), d in {-1, 0, +1}."""
        if d == 0:
            return a
        if d == -1:
            return jnp.where(at_j0, rot(a, -1), rot(a, 1))
        return jnp.where(at_jL, rot(a, 1), rot(a, -1))

    def shift_h(a, d):
        """value at row reflect(i + d), d in {-1, 0, +1}."""
        if d == 0:
            return a
        if d == -1:
            return jnp.where(at_i0, rot(a, -W), rot(a, W))
        return jnp.where(at_iL, rot(a, W), rot(a, -W))

    def conv3x3_instnorm(a, w_ref):
        """ReflectionPad(1) -> Conv3x3 (no bias) -> InstanceNorm2d on (C, HW)."""
        acc = jnp.zeros((C, HW), jnp.float32)
        for kw in range(KW):
            xc = shift_w(a, kw - 1)
            for kh in range(KH):
                win = shift_h(xc, kh - 1)          # consumed immediately (MXU)
                acc = acc + jnp.dot(w_ref[kh * KW + kw], win,
                                    preferred_element_type=jnp.float32)
        mean = jnp.mean(acc, axis=-1, keepdims=True)
        cen = acc - mean
        var = jnp.mean(cen * cen, axis=-1, keepdims=True)
        return cen * jax.lax.rsqrt(var + EPS)

    x = x_ref[0].astype(jnp.float32)                         # (C, HW)
    h = jnp.maximum(conv3x3_instnorm(x, w1_ref), 0.0)        # stage 1 + ReLU
    y = conv3x3_instnorm(h, w2_ref)                          # stage 2
    # Residual add; re-read x from VMEM so it is not held live across stages.
    o_ref[0] = (x_ref[0].astype(jnp.float32) + y).astype(o_ref.dtype)


def resnet_block(x, w1, w2):
    """x: (B, C, H, W) float32.  w1, w2: (C, C, 3, 3) PyTorch-OIHW weights."""
    B, C, H, W = x.shape
    assert H >= 2 and W >= 2, "ReflectionPad2d(1) requires H, W >= 2"
    HW = H * W

    # Lane-dense activation layout: (B, C, H*W).
    xf = x.reshape(B, C, HW)

    # OIHW -> (kh*KW + kw, co, ci): w_ref[k] @ window_k contracts over ci.
    def prep(w):
        return (jnp.transpose(w, (2, 3, 0, 1))
                .reshape(KH * KW, C, C).astype(jnp.float32))

    w1r = prep(w1)
    w2r = prep(w2)

    act_spec = pl.BlockSpec((1, C, HW), lambda b: (b, 0, 0))
    w_spec = pl.BlockSpec((KH * KW, C, C), lambda b: (0, 0, 0))  # VMEM-resident

    out = pl.pallas_call(
        functools.partial(_resnet_block_kernel, H=H, W=W),
        out_shape=jax.ShapeDtypeStruct((B, C, HW), x.dtype),
        grid=(B,),
        in_specs=[act_spec, w_spec, w_spec],
        out_specs=act_spec,
        compiler_params=pltpu.CompilerParams(
            dimension_semantics=("parallel",)),
    )(xf, w1r, w2r)
    return out.reshape(B, C, H, W)


# ----------------------------- validation ----------------------------------
def _reflect_pad(a):
    return jnp.pad(a, ((0, 0), (0, 0), (1, 1), (1, 1)), mode="reflect")


def _reference(x, w1, w2):
    def conv(a, w):
        a = _reflect_pad(a)
        return jax.lax.conv_general_dilated(
            a, w, window_strides=(1, 1), padding="VALID",
            dimension_numbers=("NCHW", "OIHW", "NCHW"))

    def inorm(a):
        m = jnp.mean(a, axis=(2, 3), keepdims=True)
        v = jnp.mean((a - m) ** 2, axis=(2, 3), keepdims=True)
        return (a - m) * jax.lax.rsqrt(v + EPS)

    h = jax.nn.relu(inorm(conv(x, w1)))
    return x + inorm(conv(h, w2))


if __name__ == "__main__":
    key = jax.random.PRNGKey(0)
    kx, k1, k2 = jax.random.split(key, 3)
    B, C, H, W = 2, 4, 16, 16  # dim = 4

    x = jax.random.normal(kx, (B, C, H, W), jnp.float32)
    fan_in = C * KH * KW
    scale = (1.0 / fan_in) ** 0.5
    w1 = jax.random.normal(k1, (C, C, KH, KW), jnp.float32) * scale  # use_bias=False
    w2 = jax.random.normal(k2, (C, C, KH, KW), jnp.float32) * scale

    out = jax.block_until_ready(jax.jit(resnet_block)(x, w1, w2))

    ref = _reference(x, w1, w2)
    assert out.shape == ref.shape and out.dtype == ref.dtype
    max_err = float(jnp.max(jnp.abs(out - ref)))
    if not jnp.allclose(out, ref, atol=1e-3, rtol=1e-3):
        raise AssertionError(f"mismatch vs reference: max abs err = {max_err:e}")
    print("KERNEL_OK")
</pallas_src>

<mosaic_0001>
module attributes {stable_mosaic.version = 11 : i64} {
  func.func @_resnet_block_kernel(%arg0: i32, %arg1: memref<1x4x256xf32, #tpu.memory_space<vmem>>, %arg2: memref<9x4x4xf32, #tpu.memory_space<vmem>>, %arg3: memref<9x4x4xf32, #tpu.memory_space<vmem>>, %arg4: memref<1x4x256xf32, #tpu.memory_space<vmem>>) attributes {dimension_semantics = [#tpu.dimension_semantics<parallel>], iteration_bounds = array<i64: 2>, scalar_prefetch = 0 : i64, scratch_operands = 0 : i64, tpu.core_type = #tpu.core_type<tc>, window_params = [{transform_indices = @transform_0, window_bounds = array<i64: 1, 4, 256>}, {pipeline_mode = #tpu.pipeline_mode<synchronous>, transform_indices = @transform_1, window_bounds = array<i64: 9, 4, 4>}, {pipeline_mode = #tpu.pipeline_mode<synchronous>, transform_indices = @transform_2, window_bounds = array<i64: 9, 4, 4>}, {transform_indices = @transform_3, window_bounds = array<i64: 1, 4, 256>}]} {
    %0 = tpu.iota {dimensions = array<i32: 1>} : vector<1x256xi32>
    %c16_i32 = arith.constant 16 : i32
    %1 = vector.broadcast %c16_i32 : i32 to vector<1x256xi32>
    %2 = arith.remsi %0, %1 : vector<1x256xi32>
    %c0_i32 = arith.constant 0 : i32
    %3 = vector.broadcast %c0_i32 : i32 to vector<1x256xi32>
    %4 = arith.cmpi eq, %2, %3 : vector<1x256xi32>
    %c15_i32 = arith.constant 15 : i32
    %5 = vector.broadcast %c15_i32 : i32 to vector<1x256xi32>
    %6 = arith.cmpi eq, %2, %5 : vector<1x256xi32>
    %c16_i32_0 = arith.constant 16 : i32
    %7 = vector.broadcast %c16_i32_0 : i32 to vector<1x256xi32>
    %8 = arith.cmpi slt, %0, %7 : vector<1x256xi32>
    %c240_i32 = arith.constant 240 : i32
    %9 = vector.broadcast %c240_i32 : i32 to vector<1x256xi32>
    %10 = arith.cmpi sge, %0, %9 : vector<1x256xi32>
    %c0 = arith.constant 0 : index
    %c0_1 = arith.constant 0 : index
    %c0_2 = arith.constant 0 : index
    %11 = vector.load %arg1[%c0, %c0_1, %c0_2] : memref<1x4x256xf32, #tpu.memory_space<vmem>>, vector<1x4x256xf32>
    %12 = vector.shape_cast %11 : vector<1x4x256xf32> to vector<4x256xf32>
    %cst = arith.constant 0.000000e+00 : f32
    %13 = vector.broadcast %cst : f32 to vector<4x256xf32>
    %c255_i32 = arith.constant 255 : i32
    %14 = tpu.dynamic_rotate %12 by %c255_i32 dim 1 : vector<4x256xf32>, i32 -> vector<4x256xf32>
    %c1_i32 = arith.constant 1 : i32
    %15 = tpu.dynamic_rotate %12 by %c1_i32 dim 1 : vector<4x256xf32>, i32 -> vector<4x256xf32>
    %16 = vector.shape_cast %4 : vector<1x256xi1> to vector<1x256xi1>
    %17 = vector.broadcast %16 : vector<1x256xi1> to vector<4x256xi1>
    %18 = arith.select %17, %14, %15 : vector<4x256xi1>, vector<4x256xf32>
    %c240_i32_3 = arith.constant 240 : i32
    %19 = tpu.dynamic_rotate %18 by %c240_i32_3 dim 1 : vector<4x256xf32>, i32 -> vector<4x256xf32>
    %c16_i32_4 = arith.constant 16 : i32
    %20 = tpu.dynamic_rotate %18 by %c16_i32_4 dim 1 : vector<4x256xf32>, i32 -> vector<4x256xf32>
    %21 = vector.shape_cast %8 : vector<1x256xi1> to vector<1x256xi1>
    %22 = vector.broadcast %21 : vector<1x256xi1> to vector<4x256xi1>
    %23 = arith.select %22, %19, %20 : vector<4x256xi1>, vector<4x256xf32>
    %c0_5 = arith.constant 0 : index
    %c0_6 = arith.constant 0 : index
    %c0_7 = arith.constant 0 : index
    %24 = vector.load %arg2[%c0_5, %c0_6, %c0_7] : memref<9x4x4xf32, #tpu.memory_space<vmem>>, vector<1x4x4xf32>
    %25 = vector.shape_cast %24 : vector<1x4x4xf32> to vector<4x4xf32>
    %cst_8 = arith.constant dense<0.000000e+00> : vector<4x256xf32>
    %26 = tpu.matmul %25, %23, %cst_8 {dimension_numbers = #tpu.dot_dimension_numbers<[1], [0], [0], [1], [0, 0, 1, 1], [], []>} : vector<4x4xf32>, vector<4x256xf32>, vector<4x256xf32> -> vector<4x256xf32>
    %27 = arith.addf %13, %26 : vector<4x256xf32>
    %c3 = arith.constant 3 : index
    %c0_9 = arith.constant 0 : index
    %c0_10 = arith.constant 0 : index
    %28 = vector.load %arg2[%c3, %c0_9, %c0_10] : memref<9x4x4xf32, #tpu.memory_space<vmem>>, vector<1x4x4xf32>
    %29 = vector.shape_cast %28 : vector<1x4x4xf32> to vector<4x4xf32>
    %cst_11 = arith.constant dense<0.000000e+00> : vector<4x256xf32>
    %30 = tpu.matmul %29, %18, %cst_11 {dimension_numbers = #tpu.dot_dimension_numbers<[1], [0], [0], [1], [0, 0, 1, 1], [], []>} : vector<4x4xf32>, vector<4x256xf32>, vector<4x256xf32> -> vector<4x256xf32>
    %31 = arith.addf %27, %30 : vector<4x256xf32>
    %c16_i32_12 = arith.constant 16 : i32
    %32 = tpu.dynamic_rotate %18 by %c16_i32_12 dim 1 : vector<4x256xf32>, i32 -> vector<4x256xf32>
    %c240_i32_13 = arith.constant 240 : i32
    %33 = tpu.dynamic_rotate %18 by %c240_i32_13 dim 1 : vector<4x256xf32>, i32 -> vector<4x256xf32>
    %34 = vector.shape_cast %10 : vector<1x256xi1> to vector<1x256xi1>
    %35 = vector.broadcast %34 : vector<1x256xi1> to vector<4x256xi1>
    %36 = arith.select %35, %32, %33 : vector<4x256xi1>, vector<4x256xf32>
    %c6 = arith.constant 6 : index
    %c0_14 = arith.constant 0 : index
    %c0_15 = arith.constant 0 : index
    %37 = vector.load %arg2[%c6, %c0_14, %c0_15] : memref<9x4x4xf32, #tpu.memory_space<vmem>>, vector<1x4x4xf32>
    %38 = vector.shape_cast %37 : vector<1x4x4xf32> to vector<4x4xf32>
    %cst_16 = arith.constant dense<0.000000e+00> : vector<4x256xf32>
    %39 = tpu.matmul %38, %36, %cst_16 {dimension_numbers = #tpu.dot_dimension_numbers<[1], [0], [0], [1], [0, 0, 1, 1], [], []>} : vector<4x4xf32>, vector<4x256xf32>, vector<4x256xf32> -> vector<4x256xf32>
    %40 = arith.addf %31, %39 : vector<4x256xf32>
    %c240_i32_17 = arith.constant 240 : i32
    %41 = tpu.dynamic_rotate %12 by %c240_i32_17 dim 1 : vector<4x256xf32>, i32 -> vector<4x256xf32>
    %c16_i32_18 = arith.constant 16 : i32
    %42 = tpu.dynamic_rotate %12 by %c16_i32_18 dim 1 : vector<4x256xf32>, i32 -> vector<4x256xf32>
    %43 = vector.shape_cast %8 : vector<1x256xi1> to vector<1x256xi1>
    %44 = vector.broadcast %43 : vector<1x256xi1> to vector<4x256xi1>
    %45 = arith.select %44, %41, %42 : vector<4x256xi1>, vector<4x256xf32>
    %c1 = arith.constant 1 : index
    %c0_19 = arith.constant 0 : index
    %c0_20 = arith.constant 0 : index
    %46 = vector.load %arg2[%c1, %c0_19, %c0_20] : memref<9x4x4xf32, #tpu.memory_space<vmem>>, vector<1x4x4xf32>
    %47 = vector.shape_cast %46 : vector<1x4x4xf32> to vector<4x4xf32>
    %cst_21 = arith.constant dense<0.000000e+00> : vector<4x256xf32>
    %48 = tpu.matmul %47, %45, %cst_21 {dimension_numbers = #tpu.dot_dimension_numbers<[1], [0], [0], [1], [0, 0, 1, 1], [], []>} : vector<4x4xf32>, vector<4x256xf32>, vector<4x256xf32> -> vector<4x256xf32>
    %49 = arith.addf %40, %48 : vector<4x256xf32>
    %c4 = arith.constant 4 : index
    %c0_22 = arith.constant 0 : index
    %c0_23 = arith.constant 0 : index
    %50 = vector.load %arg2[%c4, %c0_22, %c0_23] : memref<9x4x4xf32, #tpu.memory_space<vmem>>, vector<1x4x4xf32>
    %51 = vector.shape_cast %50 : vector<1x4x4xf32> to vector<4x4xf32>
    %cst_24 = arith.constant dense<0.000000e+00> : vector<4x256xf32>
    %52 = tpu.matmul %51, %12, %cst_24 {dimension_numbers = #tpu.dot_dimension_numbers<[1], [0], [0], [1], [0, 0, 1, 1], [], []>} : vector<4x4xf32>, vector<4x256xf32>, vector<4x256xf32> -> vector<4x256xf32>
    %53 = arith.addf %49, %52 : vector<4x256xf32>
    %c16_i32_25 = arith.constant 16 : i32
    %54 = tpu.dynamic_rotate %12 by %c16_i32_25 dim 1 : vector<4x256xf32>, i32 -> vector<4x256xf32>
    %c240_i32_26 = arith.constant 240 : i32
    %55 = tpu.dynamic_rotate %12 by %c240_i32_26 dim 1 : vector<4x256xf32>, i32 -> vector<4x256xf32>
    %56 = vector.shape_cast %10 : vector<1x256xi1> to vector<1x256xi1>
    %57 = vector.broadcast %56 : vector<1x256xi1> to vector<4x256xi1>
    %58 = arith.select %57, %54, %55 : vector<4x256xi1>, vector<4x256xf32>
    %c7 = arith.constant 7 : index
    %c0_27 = arith.constant 0 : index
    %c0_28 = arith.constant 0 : index
    %59 = vector.load %arg2[%c7, %c0_27, %c0_28] : memref<9x4x4xf32, #tpu.memory_space<vmem>>, vector<1x4x4xf32>
    %60 = vector.shape_cast %59 : vector<1x4x4xf32> to vector<4x4xf32>
    %cst_29 = arith.constant dense<0.000000e+00> : vector<4x256xf32>
    %61 = tpu.matmul %60, %58, %cst_29 {dimension_numbers = #tpu.dot_dimension_numbers<[1], [0], [0], [1], [0, 0, 1, 1], [], []>} : vector<4x4xf32>, vector<4x256xf32>, vector<4x256xf32> -> vector<4x256xf32>
    %62 = arith.addf %53, %61 : vector<4x256xf32>
    %c1_i32_30 = arith.constant 1 : i32
    %63 = tpu.dynamic_rotate %12 by %c1_i32_30 dim 1 : vector<4x256xf32>, i32 -> vector<4x256xf32>
    %c255_i32_31 = arith.constant 255 : i32
    %64 = tpu.dynamic_rotate %12 by %c255_i32_31 dim 1 : vector<4x256xf32>, i32 -> vector<4x256xf32>
    %65 = vector.shape_cast %6 : vector<1x256xi1> to vector<1x256xi1>
    %66 = vector.broadcast %65 : vector<1x256xi1> to vector<4x256xi1>
    %67 = arith.select %66, %63, %64 : vector<4x256xi1>, vector<4x256xf32>
    %c240_i32_32 = arith.constant 240 : i32
    %68 = tpu.dynamic_rotate %67 by %c240_i32_32 dim 1 : vector<4x256xf32>, i32 -> vector<4x256xf32>
    %c16_i32_33 = arith.constant 16 : i32
    %69 = tpu.dynamic_rotate %67 by %c16_i32_33 dim 1 : vector<4x256xf32>, i32 -> vector<4x256xf32>
    %70 = vector.shape_cast %8 : vector<1x256xi1> to vector<1x256xi1>
    %71 = vector.broadcast %70 : vector<1x256xi1> to vector<4x256xi1>
    %72 = arith.select %71, %68, %69 : vector<4x256xi1>, vector<4x256xf32>
    %c2 = arith.constant 2 : index
    %c0_34 = arith.constant 0 : index
    %c0_35 = arith.constant 0 : index
    %73 = vector.load %arg2[%c2, %c0_34, %c0_35] : memref<9x4x4xf32, #tpu.memory_space<vmem>>, vector<1x4x4xf32>
    %74 = vector.shape_cast %73 : vector<1x4x4xf32> to vector<4x4xf32>
    %cst_36 = arith.constant dense<0.000000e+00> : vector<4x256xf32>
    %75 = tpu.matmul %74, %72, %cst_36 {dimension_numbers = #tpu.dot_dimension_numbers<[1], [0], [0], [1], [0, 0, 1, 1], [], []>} : vector<4x4xf32>, vector<4x256xf32>, vector<4x256xf32> -> vector<4x256xf32>
    %76 = arith.addf %62, %75 : vector<4x256xf32>
    %c5 = arith.constant 5 : index
    %c0_37 = arith.constant 0 : index
    %c0_38 = arith.constant 0 : index
    %77 = vector.load %arg2[%c5, %c0_37, %c0_38] : memref<9x4x4xf32, #tpu.memory_space<vmem>>, vector<1x4x4xf32>
    %78 = vector.shape_cast %77 : vector<1x4x4xf32> to vector<4x4xf32>
    %cst_39 = arith.constant dense<0.000000e+00> : vector<4x256xf32>
    %79 = tpu.matmul %78, %67, %cst_39 {dimension_numbers = #tpu.dot_dimension_numbers<[1], [0], [0], [1], [0, 0, 1, 1], [], []>} : vector<4x4xf32>, vector<4x256xf32>, vector<4x256xf32> -> vector<4x256xf32>
    %80 = arith.addf %76, %79 : vector<4x256xf32>
    %c16_i32_40 = arith.constant 16 : i32
    %81 = tpu.dynamic_rotate %67 by %c16_i32_40 dim 1 : vector<4x256xf32>, i32 -> vector<4x256xf32>
    %c240_i32_41 = arith.constant 240 : i32
    %82 = tpu.dynamic_rotate %67 by %c240_i32_41 dim 1 : vector<4x256xf32>, i32 -> vector<4x256xf32>
    %83 = vector.shape_cast %10 : vector<1x256xi1> to vector<1x256xi1>
    %84 = vector.broadcast %83 : vector<1x256xi1> to vector<4x256xi1>
    %85 = arith.select %84, %81, %82 : vector<4x256xi1>, vector<4x256xf32>
    %c8 = arith.constant 8 : index
    %c0_42 = arith.constant 0 : index
    %c0_43 = arith.constant 0 : index
    %86 = vector.load %arg2[%c8, %c0_42, %c0_43] : memref<9x4x4xf32, #tpu.memory_space<vmem>>, vector<1x4x4xf32>
    %87 = vector.shape_cast %86 : vector<1x4x4xf32> to vector<4x4xf32>
    %cst_44 = arith.constant dense<0.000000e+00> : vector<4x256xf32>
    %88 = tpu.matmul %87, %85, %cst_44 {dimension_numbers = #tpu.dot_dimension_numbers<[1], [0], [0], [1], [0, 0, 1, 1], [], []>} : vector<4x4xf32>, vector<4x256xf32>, vector<4x256xf32> -> vector<4x256xf32>
    %89 = arith.addf %80, %88 : vector<4x256xf32>
    %cst_45 = arith.constant dense<0.000000e+00> : vector<4xf32>
    %90 = vector.multi_reduction <add>, %89, %cst_45 [1] : vector<4x256xf32> to vector<4xf32>
    %91 = vector.shape_cast %90 : vector<4xf32> to vector<4x1xf32>
    %cst_46 = arith.constant 2.560000e+02 : f32
    %92 = vector.broadcast %cst_46 : f32 to vector<4x1xf32>
    %93 = arith.divf %91, %92 : vector<4x1xf32>
    %94 = vector.broadcast %93 : vector<4x1xf32> to vector<4x256xf32>
    %95 = arith.subf %89, %94 : vector<4x256xf32>
    %96 = arith.mulf %95, %95 : vector<4x256xf32>
    %cst_47 = arith.constant dense<0.000000e+00> : vector<4xf32>
    %97 = vector.multi_reduction <add>, %96, %cst_47 [1] : vector<4x256xf32> to vector<4xf32>
    %98 = vector.shape_cast %97 : vector<4xf32> to vector<4x1xf32>
    %cst_48 = arith.constant 2.560000e+02 : f32
    %99 = vector.broadcast %cst_48 : f32 to vector<4x1xf32>
    %100 = arith.divf %98, %99 : vector<4x1xf32>
    %cst_49 = arith.constant 9.99999974E-6 : f32
    %101 = vector.broadcast %cst_49 : f32 to vector<4x1xf32>
    %102 = arith.addf %100, %101 : vector<4x1xf32>
    %103 = math.rsqrt %102 : vector<4x1xf32>
    %104 = vector.broadcast %103 : vector<4x1xf32> to vector<4x256xf32>
    %105 = arith.mulf %95, %104 : vector<4x256xf32>
    %cst_50 = arith.constant 0.000000e+00 : f32
    %106 = vector.broadcast %cst_50 : f32 to vector<4x256xf32>
    %107 = arith.maximumf %105, %106 : vector<4x256xf32>
    %cst_51 = arith.constant 0.000000e+00 : f32
    %108 = vector.broadcast %cst_51 : f32 to vector<4x256xf32>
    %c255_i32_52 = arith.constant 255 : i32
    %109 = tpu.dynamic_rotate %107 by %c255_i32_52 dim 1 : vector<4x256xf32>, i32 -> vector<4x256xf32>
    %c1_i32_53 = arith.constant 1 : i32
    %110 = tpu.dynamic_rotate %107 by %c1_i32_53 dim 1 : vector<4x256xf32>, i32 -> vector<4x256xf32>
    %111 = vector.shape_cast %4 : vector<1x256xi1> to vector<1x256xi1>
    %112 = vector.broadcast %111 : vector<1x256xi1> to vector<4x256xi1>
    %113 = arith.select %112, %109, %110 : vector<4x256xi1>, vector<4x256xf32>
    %c240_i32_54 = arith.constant 240 : i32
    %114 = tpu.dynamic_rotate %113 by %c240_i32_54 dim 1 : vector<4x256xf32>, i32 -> vector<4x256xf32>
    %c16_i32_55 = arith.constant 16 : i32
    %115 = tpu.dynamic_rotate %113 by %c16_i32_55 dim 1 : vector<4x256xf32>, i32 -> vector<4x256xf32>
    %116 = vector.shape_cast %8 : vector<1x256xi1> to vector<1x256xi1>
    %117 = vector.broadcast %116 : vector<1x256xi1> to vector<4x256xi1>
    %118 = arith.select %117, %114, %115 : vector<4x256xi1>, vector<4x256xf32>
    %c0_56 = arith.constant 0 : index
    %c0_57 = arith.constant 0 : index
    %c0_58 = arith.constant 0 : index
    %119 = vector.load %arg3[%c0_56, %c0_57, %c0_58] : memref<9x4x4xf32, #tpu.memory_space<vmem>>, vector<1x4x4xf32>
    %120 = vector.shape_cast %119 : vector<1x4x4xf32> to vector<4x4xf32>
    %cst_59 = arith.constant dense<0.000000e+00> : vector<4x256xf32>
    %121 = tpu.matmul %120, %118, %cst_59 {dimension_numbers = #tpu.dot_dimension_numbers<[1], [0], [0], [1], [0, 0, 1, 1], [], []>} : vector<4x4xf32>, vector<4x256xf32>, vector<4x256xf32> -> vector<4x256xf32>
    %122 = arith.addf %108, %121 : vector<4x256xf32>
    %c3_60 = arith.constant 3 : index
    %c0_61 = arith.constant 0 : index
    %c0_62 = arith.constant 0 : index
    %123 = vector.load %arg3[%c3_60, %c0_61, %c0_62] : memref<9x4x4xf32, #tpu.memory_space<vmem>>, vector<1x4x4xf32>
    %124 = vector.shape_cast %123 : vector<1x4x4xf32> to vector<4x4xf32>
    %cst_63 = arith.constant dense<0.000000e+00> : vector<4x256xf32>
    %125 = tpu.matmul %124, %113, %cst_63 {dimension_numbers = #tpu.dot_dimension_numbers<[1], [0], [0], [1], [0, 0, 1, 1], [], []>} : vector<4x4xf32>, vector<4x256xf32>, vector<4x256xf32> -> vector<4x256xf32>
    %126 = arith.addf %122, %125 : vector<4x256xf32>
    %c16_i32_64 = arith.constant 16 : i32
    %127 = tpu.dynamic_rotate %113 by %c16_i32_64 dim 1 : vector<4x256xf32>, i32 -> vector<4x256xf32>
    %c240_i32_65 = arith.constant 240 : i32
    %128 = tpu.dynamic_rotate %113 by %c240_i32_65 dim 1 : vector<4x256xf32>, i32 -> vector<4x256xf32>
    %129 = vector.shape_cast %10 : vector<1x256xi1> to vector<1x256xi1>
    %130 = vector.broadcast %129 : vector<1x256xi1> to vector<4x256xi1>
    %131 = arith.select %130, %127, %128 : vector<4x256xi1>, vector<4x256xf32>
    %c6_66 = arith.constant 6 : index
    %c0_67 = arith.constant 0 : index
    %c0_68 = arith.constant 0 : index
    %132 = vector.load %arg3[%c6_66, %c0_67, %c0_68] : memref<9x4x4xf32, #tpu.memory_space<vmem>>, vector<1x4x4xf32>
    %133 = vector.shape_cast %132 : vector<1x4x4xf32> to vector<4x4xf32>
    %cst_69 = arith.constant dense<0.000000e+00> : vector<4x256xf32>
    %134 = tpu.matmul %133, %131, %cst_69 {dimension_numbers = #tpu.dot_dimension_numbers<[1], [0], [0], [1], [0, 0, 1, 1], [], []>} : vector<4x4xf32>, vector<4x256xf32>, vector<4x256xf32> -> vector<4x256xf32>
    %135 = arith.addf %126, %134 : vector<4x256xf32>
    %c240_i32_70 = arith.constant 240 : i32
    %136 = tpu.dynamic_rotate %107 by %c240_i32_70 dim 1 : vector<4x256xf32>, i32 -> vector<4x256xf32>
    %c16_i32_71 = arith.constant 16 : i32
    %137 = tpu.dynamic_rotate %107 by %c16_i32_71 dim 1 : vector<4x256xf32>, i32 -> vector<4x256xf32>
    %138 = vector.shape_cast %8 : vector<1x256xi1> to vector<1x256xi1>
    %139 = vector.broadcast %138 : vector<1x256xi1> to vector<4x256xi1>
    %140 = arith.select %139, %136, %137 : vector<4x256xi1>, vector<4x256xf32>
    %c1_72 = arith.constant 1 : index
    %c0_73 = arith.constant 0 : index
    %c0_74 = arith.constant 0 : index
    %141 = vector.load %arg3[%c1_72, %c0_73, %c0_74] : memref<9x4x4xf32, #tpu.memory_space<vmem>>, vector<1x4x4xf32>
    %142 = vector.shape_cast %141 : vector<1x4x4xf32> to vector<4x4xf32>
    %cst_75 = arith.constant dense<0.000000e+00> : vector<4x256xf32>
    %143 = tpu.matmul %142, %140, %cst_75 {dimension_numbers = #tpu.dot_dimension_numbers<[1], [0], [0], [1], [0, 0, 1, 1], [], []>} : vector<4x4xf32>, vector<4x256xf32>, vector<4x256xf32> -> vector<4x256xf32>
    %144 = arith.addf %135, %143 : vector<4x256xf32>
    %c4_76 = arith.constant 4 : index
    %c0_77 = arith.constant 0 : index
    %c0_78 = arith.constant 0 : index
    %145 = vector.load %arg3[%c4_76, %c0_77, %c0_78] : memref<9x4x4xf32, #tpu.memory_space<vmem>>, vector<1x4x4xf32>
    %146 = vector.shape_cast %145 : vector<1x4x4xf32> to vector<4x4xf32>
    %cst_79 = arith.constant dense<0.000000e+00> : vector<4x256xf32>
    %147 = tpu.matmul %146, %107, %cst_79 {dimension_numbers = #tpu.dot_dimension_numbers<[1], [0], [0], [1], [0, 0, 1, 1], [], []>} : vector<4x4xf32>, vector<4x256xf32>, vector<4x256xf32> -> vector<4x256xf32>
    %148 = arith.addf %144, %147 : vector<4x256xf32>
    %c16_i32_80 = arith.constant 16 : i32
    %149 = tpu.dynamic_rotate %107 by %c16_i32_80 dim 1 : vector<4x256xf32>, i32 -> vector<4x256xf32>
    %c240_i32_81 = arith.constant 240 : i32
    %150 = tpu.dynamic_rotate %107 by %c240_i32_81 dim 1 : vector<4x256xf32>, i32 -> vector<4x256xf32>
    %151 = vector.shape_cast %10 : vector<1x256xi1> to vector<1x256xi1>
    %152 = vector.broadcast %151 : vector<1x256xi1> to vector<4x256xi1>
    %153 = arith.select %152, %149, %150 : vector<4x256xi1>, vector<4x256xf32>
    %c7_82 = arith.constant 7 : index
    %c0_83 = arith.constant 0 : index
    %c0_84 = arith.constant 0 : index
    %154 = vector.load %arg3[%c7_82, %c0_83, %c0_84] : memref<9x4x4xf32, #tpu.memory_space<vmem>>, vector<1x4x4xf32>
    %155 = vector.shape_cast %154 : vector<1x4x4xf32> to vector<4x4xf32>
    %cst_85 = arith.constant dense<0.000000e+00> : vector<4x256xf32>
    %156 = tpu.matmul %155, %153, %cst_85 {dimension_numbers = #tpu.dot_dimension_numbers<[1], [0], [0], [1], [0, 0, 1, 1], [], []>} : vector<4x4xf32>, vector<4x256xf32>, vector<4x256xf32> -> vector<4x256xf32>
    %157 = arith.addf %148, %156 : vector<4x256xf32>
    %c1_i32_86 = arith.constant 1 : i32
    %158 = tpu.dynamic_rotate %107 by %c1_i32_86 dim 1 : vector<4x256xf32>, i32 -> vector<4x256xf32>
    %c255_i32_87 = arith.constant 255 : i32
    %159 = tpu.dynamic_rotate %107 by %c255_i32_87 dim 1 : vector<4x256xf32>, i32 -> vector<4x256xf32>
    %160 = vector.shape_cast %6 : vector<1x256xi1> to vector<1x256xi1>
    %161 = vector.broadcast %160 : vector<1x256xi1> to vector<4x256xi1>
    %162 = arith.select %161, %158, %159 : vector<4x256xi1>, vector<4x256xf32>
    %c240_i32_88 = arith.constant 240 : i32
    %163 = tpu.dynamic_rotate %162 by %c240_i32_88 dim 1 : vector<4x256xf32>, i32 -> vector<4x256xf32>
    %c16_i32_89 = arith.constant 16 : i32
    %164 = tpu.dynamic_rotate %162 by %c16_i32_89 dim 1 : vector<4x256xf32>, i32 -> vector<4x256xf32>
    %165 = vector.shape_cast %8 : vector<1x256xi1> to vector<1x256xi1>
    %166 = vector.broadcast %165 : vector<1x256xi1> to vector<4x256xi1>
    %167 = arith.select %166, %163, %164 : vector<4x256xi1>, vector<4x256xf32>
    %c2_90 = arith.constant 2 : index
    %c0_91 = arith.constant 0 : index
    %c0_92 = arith.constant 0 : index
    %168 = vector.load %arg3[%c2_90, %c0_91, %c0_92] : memref<9x4x4xf32, #tpu.memory_space<vmem>>, vector<1x4x4xf32>
    %169 = vector.shape_cast %168 : vector<1x4x4xf32> to vector<4x4xf32>
    %cst_93 = arith.constant dense<0.000000e+00> : vector<4x256xf32>
    %170 = tpu.matmul %169, %167, %cst_93 {dimension_numbers = #tpu.dot_dimension_numbers<[1], [0], [0], [1], [0, 0, 1, 1], [], []>} : vector<4x4xf32>, vector<4x256xf32>, vector<4x256xf32> -> vector<4x256xf32>
    %171 = arith.addf %157, %170 : vector<4x256xf32>
    %c5_94 = arith.constant 5 : index
    %c0_95 = arith.constant 0 : index
    %c0_96 = arith.constant 0 : index
    %172 = vector.load %arg3[%c5_94, %c0_95, %c0_96] : memref<9x4x4xf32, #tpu.memory_space<vmem>>, vector<1x4x4xf32>
    %173 = vector.shape_cast %172 : vector<1x4x4xf32> to vector<4x4xf32>
    %cst_97 = arith.constant dense<0.000000e+00> : vector<4x256xf32>
    %174 = tpu.matmul %173, %162, %cst_97 {dimension_numbers = #tpu.dot_dimension_numbers<[1], [0], [0], [1], [0, 0, 1, 1], [], []>} : vector<4x4xf32>, vector<4x256xf32>, vector<4x256xf32> -> vector<4x256xf32>
    %175 = arith.addf %171, %174 : vector<4x256xf32>
    %c16_i32_98 = arith.constant 16 : i32
    %176 = tpu.dynamic_rotate %162 by %c16_i32_98 dim 1 : vector<4x256xf32>, i32 -> vector<4x256xf32>
    %c240_i32_99 = arith.constant 240 : i32
    %177 = tpu.dynamic_rotate %162 by %c240_i32_99 dim 1 : vector<4x256xf32>, i32 -> vector<4x256xf32>
    %178 = vector.shape_cast %10 : vector<1x256xi1> to vector<1x256xi1>
    %179 = vector.broadcast %178 : vector<1x256xi1> to vector<4x256xi1>
    %180 = arith.select %179, %176, %177 : vector<4x256xi1>, vector<4x256xf32>
    %c8_100 = arith.constant 8 : index
    %c0_101 = arith.constant 0 : index
    %c0_102 = arith.constant 0 : index
    %181 = vector.load %arg3[%c8_100, %c0_101, %c0_102] : memref<9x4x4xf32, #tpu.memory_space<vmem>>, vector<1x4x4xf32>
    %182 = vector.shape_cast %181 : vector<1x4x4xf32> to vector<4x4xf32>
    %cst_103 = arith.constant dense<0.000000e+00> : vector<4x256xf32>
    %183 = tpu.matmul %182, %180, %cst_103 {dimension_numbers = #tpu.dot_dimension_numbers<[1], [0], [0], [1], [0, 0, 1, 1], [], []>} : vector<4x4xf32>, vector<4x256xf32>, vector<4x256xf32> -> vector<4x256xf32>
    %184 = arith.addf %175, %183 : vector<4x256xf32>
    %cst_104 = arith.constant dense<0.000000e+00> : vector<4xf32>
    %185 = vector.multi_reduction <add>, %184, %cst_104 [1] : vector<4x256xf32> to vector<4xf32>
    %186 = vector.shape_cast %185 : vector<4xf32> to vector<4x1xf32>
    %cst_105 = arith.constant 2.560000e+02 : f32
    %187 = vector.broadcast %cst_105 : f32 to vector<4x1xf32>
    %188 = arith.divf %186, %187 : vector<4x1xf32>
    %189 = vector.broadcast %188 : vector<4x1xf32> to vector<4x256xf32>
    %190 = arith.subf %184, %189 : vector<4x256xf32>
    %191 = arith.mulf %190, %190 : vector<4x256xf32>
    %cst_106 = arith.constant dense<0.000000e+00> : vector<4xf32>
    %192 = vector.multi_reduction <add>, %191, %cst_106 [1] : vector<4x256xf32> to vector<4xf32>
    %193 = vector.shape_cast %192 : vector<4xf32> to vector<4x1xf32>
    %cst_107 = arith.constant 2.560000e+02 : f32
    %194 = vector.broadcast %cst_107 : f32 to vector<4x1xf32>
    %195 = arith.divf %193, %194 : vector<4x1xf32>
    %cst_108 = arith.constant 9.99999974E-6 : f32
    %196 = vector.broadcast %cst_108 : f32 to vector<4x1xf32>
    %197 = arith.addf %195, %196 : vector<4x1xf32>
    %198 = math.rsqrt %197 : vector<4x1xf32>
    %199 = vector.broadcast %198 : vector<4x1xf32> to vector<4x256xf32>
    %200 = arith.mulf %190, %199 : vector<4x256xf32>
    %c0_109 = arith.constant 0 : index
    %c0_110 = arith.constant 0 : index
    %c0_111 = arith.constant 0 : index
    %201 = vector.load %arg1[%c0_109, %c0_110, %c0_111] : memref<1x4x256xf32, #tpu.memory_space<vmem>>, vector<1x4x256xf32>
    %202 = vector.shape_cast %201 : vector<1x4x256xf32> to vector<4x256xf32>
    %203 = arith.addf %202, %200 : vector<4x256xf32>
    %c0_112 = arith.constant 0 : index
    %c0_113 = arith.constant 0 : index
    %c0_114 = arith.constant 0 : index
    %204 = vector.load %arg4[%c0_112, %c0_113, %c0_114] : memref<1x4x256xf32, #tpu.memory_space<vmem>>, vector<1x4x256xf32>
    %205 = vector.shape_cast %204 : vector<1x4x256xf32> to vector<4x256xf32>
    %206 = vector.shape_cast %203 : vector<4x256xf32> to vector<1x4x256xf32>
    tpu.vector_store %arg4[%c0_112, %c0_113, %c0_114], %206 {strides = array<i32>} : memref<1x4x256xf32, #tpu.memory_space<vmem>>, vector<1x4x256xf32>,
    return
  }
  func.func @transform_0(%arg0: i32) -> (i32, i32, i32) {
    %c0_i32 = arith.constant 0 : i32
    %c0_i32_0 = arith.constant 0 : i32
    %c0_i32_1 = arith.constant 0 : i32
    return %arg0, %c0_i32, %c0_i32_0 : i32, i32, i32
  }
  func.func @transform_1(%arg0: i32) -> (i32, i32, i32) {
    %c0_i32 = arith.constant 0 : i32
    %c0_i32_0 = arith.constant 0 : i32
    %c0_i32_1 = arith.constant 0 : i32
    %c0_i32_2 = arith.constant 0 : i32
    return %c0_i32, %c0_i32_0, %c0_i32_1 : i32, i32, i32
  }
  func.func @transform_2(%arg0: i32) -> (i32, i32, i32) {
    %c0_i32 = arith.constant 0 : i32
    %c0_i32_0 = arith.constant 0 : i32
    %c0_i32_1 = arith.constant 0 : i32
    %c0_i32_2 = arith.constant 0 : i32
    return %c0_i32, %c0_i32_0, %c0_i32_1 : i32, i32, i32
  }
  func.func @transform_3(%arg0: i32) -> (i32, i32, i32) {
    %c0_i32 = arith.constant 0 : i32
    %c0_i32_0 = arith.constant 0 : i32
    %c0_i32_1 = arith.constant 0 : i32
    return %arg0, %c0_i32, %c0_i32_0 : i32, i32, i32
  }
}

</mosaic_0001>

<llo_original>
// kernel: resnet_block.1
$region0: #{resnet_block.1}
  #allocation0 [shape = 'u32[]', space=smem, size = 0x4, offset = 0x4, fixed_abs, tag = 'smem constant byte address 0x4 - core index']
  #allocation1 [shape = 'u32[144,128]{1,0:T(1,128)}', space=vmem, size = 0x12000, scoped, tag = 'internal scratch']
  %s0 = inlined_call_operand.vmem [shape: f32[2,4,256], index: 0, kind: input, shape index: {}]
  %s1 = inlined_call_operand.vmem [shape: f32[9,4,4], index: 1, kind: input, shape index: {}]
  %s2 = inlined_call_operand.vmem [shape: f32[9,4,4], index: 2, kind: input, shape index: {}]
  %s3 = inlined_call_operand.vmem [shape: f32[2,4,256], index: 3, kind: output, shape index: {}]
  %s4 = sld [smem:[#allocation0]]
  $region45: #{resnet_block.1} parent=0
    _
  %s6 = ssub.s32 1, %s4
  %s7 = scalar_select 0, %s6, %s4
  loop: start=0, step=1, limit=4
  $region2: #{resnet_block.1} parent=0 // loop_pre_header
    _
  $region3: #{resnet_block.1} parent=0 // loop_header
    %s9 = sphi 0, %s13
    %p10 = scmp.ge.s32.totalorder %s9, 4
    %s19 = sphi 0, %s21
    %s22 = sphi 0, %s19
    %s23 = sphi 0, %s22
    %s39 = sphi 0, %s23
    %s43 = sphi 0, %s43
    %s45 = sphi 0, %s43
    %s46 = sphi 0, %s45
    %s60 = sphi 0, %s46
    %s64 = sphi 0, %s64
    %s66 = sphi 0, %s64
    %s67 = sphi 0, %s66
    %s81 = sphi 0, %s67
    %s87 = sphi 0, %s89
    %s90 = sphi 0, %s87
    %s91 = sphi 0, %s90
    %s107 = sphi 0, %s91
  $region4: #{resnet_block.1} parent=0 // loop_header_branch
    %12 = sbr.rel (%p10) target = $region8
  $region5: #{resnet_block.1} parent=0 // loop_body
    %s14 = ssub.s32 %s9, 1
    %s15 = ssub.s32 %s9, 2
    %s16 = sadd.s32 %s9, 1
    %s17 = ssub.s32 %s9, %s16
    %p18 = scmp.eq.s32.totalorder %s17, 0
    %s20 = sadd.s32 %s19, 1
    %s21 = scalar_select %p18, %s19, %s20
    %p24 = pneg %p18
    %p25 = scmp.eq.s32.totalorder %s9, 1
    %p26 = por %p24, %p25
    %p27 = scmp.ne.s32.totalorder %s19, %s22
    %p28 = scmp.eq.s32.totalorder %s9, 0
    %p29 = por %p27, %p28
    %p30 = scmp.ne.s32.totalorder %s19, %s22
    %p31 = scmp.eq.s32.totalorder %s14, 1
    %p32 = por %p30, %p31
    %p33 = scmp.ne.s32.totalorder %s22, %s23
    %p34 = scmp.eq.s32.totalorder %s14, 0
    %p35 = por %p33, %p34
    %p36 = scmp.ne.s32.totalorder %s22, %s23
    %p37 = scmp.eq.s32.totalorder %s15, 1
    %p38 = por %p36, %p37
    %p40 = scmp.ne.s32.totalorder %s23, %s39
    %p41 = scmp.eq.s32.totalorder %s15, 0
    %p42 = por %p40, %p41
    %s44 = sadd.s32 %s43, 1
    %p47 = scmp.eq.s32.totalorder %s9, 1
    %p48 = scmp.ne.s32.totalorder %s43, %s45
    %p49 = scmp.eq.s32.totalorder %s9, 0
    %p50 = por %p48, %p49
    %p51 = scmp.ne.s32.totalorder %s43, %s45
    %p52 = scmp.eq.s32.totalorder %s14, 1
    %p53 = por %p51, %p52
    %p54 = scmp.ne.s32.totalorder %s45, %s46
    %p55 = scmp.eq.s32.totalorder %s14, 0
    %p56 = por %p54, %p55
    %p57 = scmp.ne.s32.totalorder %s45, %s46
    %p58 = scmp.eq.s32.totalorder %s15, 1
    %p59 = por %p57, %p58
    %p61 = scmp.ne.s32.totalorder %s46, %s60
    %p62 = scmp.eq.s32.totalorder %s15, 0
    %p63 = por %p61, %p62
    %s65 = sadd.s32 %s64, 1
    %p68 = scmp.eq.s32.totalorder %s9, 1
    %p69 = scmp.ne.s32.totalorder %s64, %s66
    %p70 = scmp.eq.s32.totalorder %s9, 0
    %p71 = por %p69, %p70
    %p72 = scmp.ne.s32.totalorder %s64, %s66
    %p73 = scmp.eq.s32.totalorder %s14, 1
    %p74 = por %p72, %p73
    %p75 = scmp.ne.s32.totalorder %s66, %s67
    %p76 = scmp.eq.s32.totalorder %s14, 0
    %p77 = por %p75, %p76
    %p78 = scmp.ne.s32.totalorder %s66, %s67
    %p79 = scmp.eq.s32.totalorder %s15, 1
    %p80 = por %p78, %p79
    %p82 = scmp.ne.s32.totalorder %s67, %s81
    %p83 = scmp.eq.s32.totalorder %s15, 0
    %p84 = por %p82, %p83
    %s85 = ssub.s32 %s9, %s16
    %p86 = scmp.eq.s32.totalorder %s85, 0
    %s88 = sadd.s32 %s87, 1
    %s89 = scalar_select %p86, %s87, %s88
    %p92 = pneg %p86
    %p93 = scmp.eq.s32.totalorder %s9, 1
    %p94 = por %p92, %p93
    %p95 = scmp.ne.s32.totalorder %s87, %s90
    %p96 = scmp.eq.s32.totalorder %s9, 0
    %p97 = por %p95, %p96
    %p98 = scmp.ne.s32.totalorder %s87, %s90
    %p99 = scmp.eq.s32.totalorder %s14, 1
    %p100 = por %p98, %p99
    %p101 = scmp.ne.s32.totalorder %s90, %s91
    %p102 = scmp.eq.s32.totalorder %s14, 0
    %p103 = por %p101, %p102
    %p104 = scmp.ne.s32.totalorder %s90, %s91
    %p105 = scmp.eq.s32.totalorder %s15, 1
    %p106 = por %p104, %p105
    %p108 = scmp.ne.s32.totalorder %s91, %s107
    %p109 = scmp.eq.s32.totalorder %s15, 0
    %p110 = por %p108, %p109
    %p111 = scmp.le.s32.totalorder 1, %s9
    %p112 = scmp.lt.s32.totalorder %s9, 3
    %p113 = pnand %p111, %p112
    %p114 = pneg %p113
    // Predicated region
    $region9: #{resnet_block.1} parent=5 // pred_check
      _
    $region10: #{resnet_block.1} parent=5 // pred_check_branch
      %116 = sbr.rel (%p113) target = $region12
    $region11: #{resnet_block.1} parent=5 // pred_region
      %s117 = ssub.s32 %s9, 1
      // Predicated region
      $region13: #{resnet_block.1} parent=11 // pred_check
        %p118 = pneg %p56
      $region14: #{resnet_block.1} parent=11 // pred_check_branch
        %120 = sbr.rel (%p118) target = $region16
      $region15: #{resnet_block.1} parent=11 // pred_region
        _
      $region16: #{resnet_block.1} parent=11 // pred_fallthru
        _
      // Predicated region
      $region17: #{resnet_block.1} parent=11 // pred_check
        %p121 = pneg %p77
      $region18: #{resnet_block.1} parent=11 // pred_check_branch
        %123 = sbr.rel (%p121) target = $region20
      $region19: #{resnet_block.1} parent=11 // pred_region
        _
      $region20: #{resnet_block.1} parent=11 // pred_fallthru
        _
    $region12: #{resnet_block.1} parent=5 // pred_fallthru
      _
    %p124 = scmp.lt.s32.totalorder %s9, 2
    // Predicated region
    $region21: #{resnet_block.1} parent=5 // pred_check
      %p125 = pneg %p124
    $region22: #{resnet_block.1} parent=5 // pred_check_branch
      %127 = sbr.rel (%p125) target = $region24
    $region23: #{resnet_block.1} parent=5 // pred_region
      // Predicated region
      $region25: #{resnet_block.1} parent=23 // pred_check
        %p128 = pneg %p29
      $region26: #{resnet_block.1} parent=23 // pred_check_branch
        %130 = sbr.rel (%p128) target = $region28
      $region27: #{resnet_block.1} parent=23 // pred_region
        %p131 = scmp.lt.s32.totalorder %s9, 1
        %s132 = scalar_select %p131, %s9, 1
        %s133 = smul.addr %s132, 2
        %s134 = smul.addr %s133, 4
        %s135 = scalar_lea.vmem %s0, %s134
      $region28: #{resnet_block.1} parent=23 // pred_fallthru
        _
    $region24: #{resnet_block.1} parent=5 // pred_fallthru
      _
    %p136 = scmp.le.s32.totalorder 1, %s9
    %p137 = scmp.lt.s32.totalorder %s9, 3
    %p138 = pnand %p136, %p137
    %p139 = pneg %p138
    // Predicated region
    $region29: #{resnet_block.1} parent=5 // pred_check
      _
    $region30: #{resnet_block.1} parent=5 // pred_check_branch
      %141 = sbr.rel (%p138) target = $region32
    $region31: #{resnet_block.1} parent=5 // pred_region
      %s142 = ssub.s32 %s9, 1
      %p143 = scmp.lt.s32.totalorder %s14, 1
      %s144 = scalar_select %p143, %s14, 1
      %s145 = smul.addr %s144, 2
      %s146 = smul.addr %s145, 4
      %s147 = scalar_lea.vmem %s0, %s146
      %p148 = pneg %p35
      %p149 = pneg %p32
      %p150 = pneg %p56
      %p151 = pneg %p53
      %p152 = pneg %p77
      %p153 = pneg %p74
      %p154 = pneg %p103
      %p155 = pneg %p100
      %p156 = scmp.lt.s32.totalorder %s14, 1
      %s157 = scalar_select %p156, %s14, 1
      %s158 = smul.addr %s157, 2
      %s159 = smul.addr %s158, 4
      %s160 = scalar_lea.vmem %s3, %s159
      %p161 = scmp.lt.s32.totalorder %s14, 1
      %s162 = scalar_select %p161, %s14, 1
      %s163 = smul.addr %s162, 2
      %s164 = smul.addr %s163, 4
      %s165 = scalar_lea.vmem %s0, %s164
      %p166 = scmp.lt.s32.totalorder %s14, 1
      %s167 = scalar_select %p166, %s14, 1
      %s168 = smul.addr %s167, 2
      %s169 = smul.addr %s168, 4
      %s170 = scalar_lea.vmem %s3, %s169
      %v171 = vlaneseq
      %v172 = vand.u32 %v171, 127
      %v173 = vadd.s32 %v172, 128
      %vm174 = vcmp.lt.s32.totalorder %v172, 0
      %v175 = vsub.s32 0, %v172
      %v176 = vsel %vm174, %v175, %v172
      %v177 = vshrl.u32 %v176, 4
      %v178 = vand.u32 %v176, 15
      %v179 = vsub.s32 0, %v178
      %v180 = vsel %vm174, %v179, %v178
      %vm181 = vcmp.lt.s32.totalorder %v173, 0
      %v182 = vsub.s32 0, %v173
      %v183 = vsel %vm181, %v182, %v173
      %v184 = vshrl.u32 %v183, 4
      %v185 = vand.u32 %v183, 15
      %v186 = vsub.s32 0, %v185
      %v187 = vsel %vm181, %v186, %v185
      %vm188 = vcmp.eq.s32.totalorder %v180, 0
      %vm189 = vcmp.eq.s32.totalorder %v187, 0
      %vm190 = vcmp.eq.s32.totalorder %v180, 15
      %vm191 = vcmp.eq.s32.totalorder %v187, 15
      %vm192 = vcmp.lt.s32.totalorder %v172, 16
      %vm193 = vcmp.lt.s32.totalorder %v173, 16
      %vm194 = vcmp.ge.s32.totalorder %v172, 240
      %vm195 = vcmp.ge.s32.totalorder %v173, 240
      %v196 = vld [vmem:[%s165] sm:$0xff]
      %v198 = vcombine.high %v196, %v196
      %200 = vrot.lane.b32.xlu0 %v196, 127
      %v201 = vpop.permute.xlu0 %200
      %202 = vrot.lane.b32.xlu0 %v198, 127
      %v203 = vpop.permute.xlu0 %202
      %vm204 = vcmp.lt.s32.totalorder %v172, 127
      %v205 = vsel %vm204, %v201, %v203
      %v206 = vsel %vm204, %v203, %v201
      %207 = vrot.lane.b32.xlu0 %v196, 1
      %v208 = vpop.permute.xlu0 %207
      %209 = vrot.lane.b32.xlu0 %v198, 1
      %v210 = vpop.permute.xlu0 %209
      %vm211 = vcmp.lt.s32.totalorder %v172, 1
      %v212 = vsel %vm211, %v208, %v210
      %v213 = vsel %vm211, %v210, %v208
      %v214 = vsel %vm188, 1, 0
      %v215 = vsel %vm189, 1, 0
      %vm216 = vcmp.eq.s32.totalorder %v214, 1
      %vm217 = vcmp.eq.s32.totalorder %v215, 1
      %v218 = vsel %vm216, %v205, %v213
      %v219 = vsel %vm217, %v206, %v212
      %220 = vrot.lane.b32.xlu0 %v218, 112
      %v221 = vpop.permute.xlu0 %220
      %222 = vrot.lane.b32.xlu0 %v219, 112
      %v223 = vpop.permute.xlu0 %222
      %vm224 = vcmp.lt.s32.totalorder %v172, 112
      %v225 = vsel %vm224, %v221, %v223
      %v226 = vsel %vm224, %v223, %v221
      %227 = vrot.lane.b32.xlu0 %v218, 16
      %v228 = vpop.permute.xlu0 %227
      %229 = vrot.lane.b32.xlu0 %v219, 16
      %v230 = vpop.permute.xlu0 %229
      %v231 = vsel %vm192, %v228, %v230
      %v232 = vsel %vm192, %v230, %v228
      %v233 = vsel %vm192, 1, 0
      %v234 = vsel %vm193, 1, 0
      %vm235 = vcmp.eq.s32.totalorder %v233, 1
      %vm236 = vcmp.eq.s32.totalorder %v234, 1
      %v237 = vsel %vm235, %v225, %v232
      %v238 = vsel %vm236, %v226, %v231
      %v239 = vld [vmem:[%s1] sm:$0xf]
      %s240 = scalar_lea.vmem %s1, 12
      %v241 = vld [vmem:[%s240] sm:$0xf]
      %vm242 = vcmask 31744
      %v244 = vsel %vm242, %v241, 0
      %vm246 = vcmask 1043456
      %v248 = vsel %vm246, %v218, 0
      %v251 = vsel %vm246, %v219, 0
      %253 = vmatprep.subr.mxu0 %v251
      %254 = vmatpush1.msra.mxu0 %v248
      %255 = vmatprep.subr.mxu0 0.0
      %256 = vmatpush1.msra.mxu0 0.0
      %257 = vmatprep.subr.mxu0 0.0
      %258 = vmatpush1.msra.mxu0 0.0
      %259 = vmatprep.subr.mxu0 0.0
      %260 = vmatpush1.msra.mxu0 0.0
      %261 = vmatprep.subr.mxu0 0.0
      %262 = vmatpush1.msra.mxu0 0.0
      %263 = vmatprep.subr.mxu0 0.0
      %264 = vmatpush1.msra.mxu0 0.0
      %265 = vmatprep.subr.mxu0 0.0
      %266 = vmatpush1.msra.mxu0 0.0
      %267 = vmatprep.subr.mxu0 0.0
      %268 = vmatpush1.msra.mxu0 0.0
      %269 = vmatprep.subr.mxu0 0.0
      %270 = vmatpush1.msra.mxu0 0.0
      %271 = vmatprep.subr.mxu0 0.0
      %272 = vmatpush1.msra.mxu0 0.0
      %273 = vmatprep.subr.mxu0 0.0
      %274 = vmatpush1.msra.mxu0 0.0
      %275 = vmatprep.subr.mxu0 0.0
      %276 = vmatpush1.msra.mxu0 0.0
      %277 = vmatprep.subr.mxu0 0.0
      %278 = vmatpush1.msra.mxu0 0.0
      %279 = vmatprep.subr.mxu0 0.0
      %280 = vmatpush1.msra.mxu0 0.0
      %281 = vmatprep.subr.mxu0 0.0
      %282 = vmatpush1.msra.mxu0 0.0
      %283 = vmatprep.subr.mxu0 0.0
      %284 = vmatpush1.msra.mxu0 0.0
      %285 = vmatprep.subr.mxu0 0.0
      %286 = vmatpush1.msra.mxu0 0.0
      %287 = vmatprep.subr.mxu0 0.0
      %288 = vmatpush1.msra.mxu0 0.0
      %289 = vmatprep.subr.mxu0 0.0
      %290 = vmatpush1.msra.mxu0 0.0
      %291 = vmatprep.subr.mxu0 0.0
      %292 = vmatpush1.msra.mxu0 0.0
      %293 = vmatprep.subr.mxu0 0.0
      %294 = vmatpush1.msra.mxu0 0.0
      %295 = vmatprep.subr.mxu0 0.0
      %296 = vmatpush1.msra.mxu0 0.0
      %297 = vmatprep.subr.mxu0 0.0
      %298 = vmatpush1.msra.mxu0 0.0
      %299 = vmatprep.subr.mxu0 0.0
      %300 = vmatpush1.msra.mxu0 0.0
      %301 = vmatprep.subr.mxu0 0.0
      %302 = vmatpush1.msra.mxu0 0.0
      %303 = vmatprep.subr.mxu0 0.0
      %304 = vmatpush1.msra.mxu0 0.0
      %305 = vmatprep.subr.mxu0 0.0
      %306 = vmatpush1.msra.mxu0 0.0
      %307 = vmatprep.subr.mxu0 0.0
      %308 = vmatpush1.msra.mxu0 0.0
      %309 = vmatprep.subr.mxu0 0.0
      %310 = vmatpush1.msra.mxu0 0.0
      %311 = vmatprep.subr.mxu0 0.0
      %312 = vmatpush1.msra.mxu0 0.0
      %313 = vmatprep.subr.mxu0 0.0
      %314 = vmatpush1.msra.mxu0 0.0
      %315 = vmatprep.subr.mxu0 0.0
      %316 = vmatpush1.msra.mxu0 0.0
      %317 = vmatprep.mubr.f32.mxu0 0.0
      %318 = vmatmul.mubr.f32.gmra.mrb[0].mxu0 %v244
      %v319 = vpop.f32.mrb[0].mxu0
      %v320 = vadd.f32 0.0, %v319
      %v321 = vpop.f32.mrb[0].mxu0
      %v322 = vadd.f32 0.0, %v321
      %323 = vdwg.mxu0
      %v325 = vsel %vm242, %v239, 0
      %v328 = vsel %vm246, %v237, 0
      %v331 = vsel %vm246, %v238, 0
      %333 = vmatprep.subr.mxu0 %v331
      %334 = vmatpush1.msra.mxu0 %v328
      %335 = vmatprep.subr.mxu0 0.0
      %336 = vmatpush1.msra.mxu0 0.0
      %337 = vmatprep.subr.mxu0 0.0
      %338 = vmatpush1.msra.mxu0 0.0
      %339 = vmatprep.subr.mxu0 0.0
      %340 = vmatpush1.msra.mxu0 0.0
      %341 = vmatprep.subr.mxu0 0.0
      %342 = vmatpush1.msra.mxu0 0.0
      %343 = vmatprep.subr.mxu0 0.0
      %344 = vmatpush1.msra.mxu0 0.0
      %345 = vmatprep.subr.mxu0 0.0
      %346 = vmatpush1.msra.mxu0 0.0
      %347 = vmatprep.subr.mxu0 0.0
      %348 = vmatpush1.msra.mxu0 0.0
      %349 = vmatprep.subr.mxu0 0.0
      %350 = vmatpush1.msra.mxu0 0.0
      %351 = vmatprep.subr.mxu0 0.0
      %352 = vmatpush1.msra.mxu0 0.0
      %353 = vmatprep.subr.mxu0 0.0
      %354 = vmatpush1.msra.mxu0 0.0
      %355 = vmatprep.subr.mxu0 0.0
      %356 = vmatpush1.msra.mxu0 0.0
      %357 = vmatprep.subr.mxu0 0.0
      %358 = vmatpush1.msra.mxu0 0.0
      %359 = vmatprep.subr.mxu0 0.0
      %360 = vmatpush1.msra.mxu0 0.0
      %361 = vmatprep.subr.mxu0 0.0
      %362 = vmatpush1.msra.mxu0 0.0
      %363 = vmatprep.subr.mxu0 0.0
      %364 = vmatpush1.msra.mxu0 0.0
      %365 = vmatprep.subr.mxu0 0.0
      %366 = vmatpush1.msra.mxu0 0.0
      %367 = vmatprep.subr.mxu0 0.0
      %368 = vmatpush1.msra.mxu0 0.0
      %369 = vmatprep.subr.mxu0 0.0
      %370 = vmatpush1.msra.mxu0 0.0
      %371 = vmatprep.subr.mxu0 0.0
      %372 = vmatpush1.msra.mxu0 0.0
      %373 = vmatprep.subr.mxu0 0.0
      %374 = vmatpush1.msra.mxu0 0.0
      %375 = vmatprep.subr.mxu0 0.0
      %376 = vmatpush1.msra.mxu0 0.0
      %377 = vmatprep.subr.mxu0 0.0
      %378 = vmatpush1.msra.mxu0 0.0
      %379 = vmatprep.subr.mxu0 0.0
      %380 = vmatpush1.msra.mxu0 0.0
      %381 = vmatprep.subr.mxu0 0.0
      %382 = vmatpush1.msra.mxu0 0.0
      %383 = vmatprep.subr.mxu0 0.0
      %384 = vmatpush1.msra.mxu0 0.0
      %385 = vmatprep.subr.mxu0 0.0
      %386 = vmatpush1.msra.mxu0 0.0
      %387 = vmatprep.subr.mxu0 0.0
      %388 = vmatpush1.msra.mxu0 0.0
      %389 = vmatprep.subr.mxu0 0.0
      %390 = vmatpush1.msra.mxu0 0.0
      %391 = vmatprep.subr.mxu0 0.0
      %392 = vmatpush1.msra.mxu0 0.0
      %393 = vmatprep.subr.mxu0 0.0
      %394 = vmatpush1.msra.mxu0 0.0
      %395 = vmatprep.subr.mxu0 0.0
      %396 = vmatpush1.msra.mxu0 0.0
      %397 = vmatprep.mubr.f32.mxu0 0.0
      %398 = vmatmul.mubr.f32.gmra.mrb[0].mxu0 %v325
      %v399 = vpop.f32.mrb[0].mxu0
      %v400 = vadd.f32 %v320, %v399
      %v401 = vpop.f32.mrb[0].mxu0
      %v402 = vadd.f32 %v322, %v401
      %403 = vdwg.mxu0
      %v404 = vsel %vm194, 1, 0
      %v405 = vsel %vm195, 1, 0
      %vm406 = vcmp.eq.s32.totalorder %v404, 1
      %vm407 = vcmp.eq.s32.totalorder %v405, 1
      %v408 = vsel %vm406, %v232, %v225
      %v409 = vsel %vm407, %v231, %v226
      %s410 = scalar_lea.vmem %s1, 24
      %v411 = vld [vmem:[%s410] sm:$0xf]
      %v413 = vsel %vm242, %v411, 0
      %v416 = vsel %vm246, %v408, 0
      %v419 = vsel %vm246, %v409, 0
      %421 = vmatprep.subr.mxu0 %v419
      %422 = vmatpush1.msra.mxu0 %v416
      %423 = vmatprep.subr.mxu0 0.0
      %424 = vmatpush1.msra.mxu0 0.0
      %425 = vmatprep.subr.mxu0 0.0
      %426 = vmatpush1.msra.mxu0 0.0
      %427 = vmatprep.subr.mxu0 0.0
      %428 = vmatpush1.msra.mxu0 0.0
      %429 = vmatprep.subr.mxu0 0.0
      %430 = vmatpush1.msra.mxu0 0.0
      %431 = vmatprep.subr.mxu0 0.0
      %432 = vmatpush1.msra.mxu0 0.0
      %433 = vmatprep.subr.mxu0 0.0
      %434 = vmatpush1.msra.mxu0 0.0
      %435 = vmatprep.subr.mxu0 0.0
      %436 = vmatpush1.msra.mxu0 0.0
      %437 = vmatprep.subr.mxu0 0.0
      %438 = vmatpush1.msra.mxu0 0.0
      %439 = vmatprep.subr.mxu0 0.0
      %440 = vmatpush1.msra.mxu0 0.0
      %441 = vmatprep.subr.mxu0 0.0
      %442 = vmatpush1.msra.mxu0 0.0
      %443 = vmatprep.subr.mxu0 0.0
      %444 = vmatpush1.msra.mxu0 0.0
      %445 = vmatprep.subr.mxu0 0.0
      %446 = vmatpush1.msra.mxu0 0.0
      %447 = vmatprep.subr.mxu0 0.0
      %448 = vmatpush1.msra.mxu0 0.0
      %449 = vmatprep.subr.mxu0 0.0
      %450 = vmatpush1.msra.mxu0 0.0
      %451 = vmatprep.subr.mxu0 0.0
      %452 = vmatpush1.msra.mxu0 0.0
      %453 = vmatprep.subr.mxu0 0.0
      %454 = vmatpush1.msra.mxu0 0.0
      %455 = vmatprep.subr.mxu0 0.0
      %456 = vmatpush1.msra.mxu0 0.0
      %457 = vmatprep.subr.mxu0 0.0
      %458 = vmatpush1.msra.mxu0 0.0
      %459 = vmatprep.subr.mxu0 0.0
      %460 = vmatpush1.msra.mxu0 0.0
      %461 = vmatprep.subr.mxu0 0.0
      %462 = vmatpush1.msra.mxu0 0.0
      %463 = vmatprep.subr.mxu0 0.0
      %464 = vmatpush1.msra.mxu0 0.0
      %465 = vmatprep.subr.mxu0 0.0
      %466 = vmatpush1.msra.mxu0 0.0
      %467 = vmatprep.subr.mxu0 0.0
      %468 = vmatpush1.msra.mxu0 0.0
      %469 = vmatprep.subr.mxu0 0.0
      %470 = vmatpush1.msra.mxu0 0.0
      %471 = vmatprep.subr.mxu0 0.0
      %472 = vmatpush1.msra.mxu0 0.0
      %473 = vmatprep.subr.mxu0 0.0
      %474 = vmatpush1.msra.mxu0 0.0
      %475 = vmatprep.subr.mxu0 0.0
      %476 = vmatpush1.msra.mxu0 0.0
      %477 = vmatprep.subr.mxu0 0.0
      %478 = vmatpush1.msra.mxu0 0.0
      %479 = vmatprep.subr.mxu0 0.0
      %480 = vmatpush1.msra.mxu0 0.0
      %481 = vmatprep.subr.mxu0 0.0
      %482 = vmatpush1.msra.mxu0 0.0
      %483 = vmatprep.subr.mxu0 0.0
      %484 = vmatpush1.msra.mxu0 0.0
      %485 = vmatprep.mubr.f32.mxu0 0.0
      %486 = vmatmul.mubr.f32.gmra.mrb[0].mxu0 %v413
      %v487 = vpop.f32.mrb[0].mxu0
      %v488 = vadd.f32 0.0, %v487
      %v489 = vpop.f32.mrb[0].mxu0
      %v490 = vadd.f32 0.0, %v489
      %491 = vdwg.mxu0
      %v492 = vadd.f32 %v400, %v488
      %v493 = vadd.f32 %v402, %v490
      %494 = vrot.lane.b32.xlu0 %v196, 112
      %v495 = vpop.permute.xlu0 %494
      %496 = vrot.lane.b32.xlu0 %v198, 112
      %v497 = vpop.permute.xlu0 %496
      %v498 = vsel %vm224, %v495, %v497
      %v499 = vsel %vm224, %v497, %v495
      %500 = vrot.lane.b32.xlu0 %v196, 16
      %v501 = vpop.permute.xlu0 %500
      %502 = vrot.lane.b32.xlu0 %v198, 16
      %v503 = vpop.permute.xlu0 %502
      %v504 = vsel %vm192, %v501, %v503
      %v505 = vsel %vm192, %v503, %v501
      %v506 = vsel %vm235, %v498, %v505
      %v507 = vsel %vm236, %v499, %v504
      %s508 = scalar_lea.vmem %s1, 4
      %v509 = vld [vmem:[%s508] sm:$0xf]
      %v511 = vsel %vm242, %v509, 0
      %v514 = vsel %vm246, %v506, 0
      %v517 = vsel %vm246, %v507, 0
      %519 = vmatprep.subr.mxu0 %v517
      %520 = vmatpush1.msra.mxu0 %v514
      %521 = vmatprep.subr.mxu0 0.0
      %522 = vmatpush1.msra.mxu0 0.0
      %523 = vmatprep.subr.mxu0 0.0
      %524 = vmatpush1.msra.mxu0 0.0
      %525 = vmatprep.subr.mxu0 0.0
      %526 = vmatpush1.msra.mxu0 0.0
      %527 = vmatprep.subr.mxu0 0.0
      %528 = vmatpush1.msra.mxu0 0.0
      %529 = vmatprep.subr.mxu0 0.0
      %530 = vmatpush1.msra.mxu0 0.0
      %531 = vmatprep.subr.mxu0 0.0
      %532 = vmatpush1.msra.mxu0 0.0
      %533 = vmatprep.subr.mxu0 0.0
      %534 = vmatpush1.msra.mxu0 0.0
      %535 = vmatprep.subr.mxu0 0.0
      %536 = vmatpush1.msra.mxu0 0.0
      %537 = vmatprep.subr.mxu0 0.0
      %538 = vmatpush1.msra.mxu0 0.0
      %539 = vmatprep.subr.mxu0 0.0
      %540 = vmatpush1.msra.mxu0 0.0
      %541 = vmatprep.subr.mxu0 0.0
      %542 = vmatpush1.msra.mxu0 0.0
      %543 = vmatprep.subr.mxu0 0.0
      %544 = vmatpush1.msra.mxu0 0.0
      %545 = vmatprep.subr.mxu0 0.0
      %546 = vmatpush1.msra.mxu0 0.0
      %547 = vmatprep.subr.mxu0 0.0
      %548 = vmatpush1.msra.mxu0 0.0
      %549 = vmatprep.subr.mxu0 0.0
      %550 = vmatpush1.msra.mxu0 0.0
      %551 = vmatprep.subr.mxu0 0.0
      %552 = vmatpush1.msra.mxu0 0.0
      %553 = vmatprep.subr.mxu0 0.0
      %554 = vmatpush1.msra.mxu0 0.0
      %555 = vmatprep.subr.mxu0 0.0
      %556 = vmatpush1.msra.mxu0 0.0
      %557 = vmatprep.subr.mxu0 0.0
      %558 = vmatpush1.msra.mxu0 0.0
      %559 = vmatprep.subr.mxu0 0.0
      %560 = vmatpush1.msra.mxu0 0.0
      %561 = vmatprep.subr.mxu0 0.0
      %562 = vmatpush1.msra.mxu0 0.0
      %563 = vmatprep.subr.mxu0 0.0
      %564 = vmatpush1.msra.mxu0 0.0
      %565 = vmatprep.subr.mxu0 0.0
      %566 = vmatpush1.msra.mxu0 0.0
      %567 = vmatprep.subr.mxu0 0.0
      %568 = vmatpush1.msra.mxu0 0.0
      %569 = vmatprep.subr.mxu0 0.0
      %570 = vmatpush1.msra.mxu0 0.0
      %571 = vmatprep.subr.mxu0 0.0
      %572 = vmatpush1.msra.mxu0 0.0
      %573 = vmatprep.subr.mxu0 0.0
      %574 = vmatpush1.msra.mxu0 0.0
      %575 = vmatprep.subr.mxu0 0.0
      %576 = vmatpush1.msra.mxu0 0.0
      %577 = vmatprep.subr.mxu0 0.0
      %578 = vmatpush1.msra.mxu0 0.0
      %579 = vmatprep.subr.mxu0 0.0
      %580 = vmatpush1.msra.mxu0 0.0
      %581 = vmatprep.subr.mxu0 0.0
      %582 = vmatpush1.msra.mxu0 0.0
      %583 = vmatprep.mubr.f32.mxu0 0.0
      %584 = vmatmul.mubr.f32.gmra.mrb[0].mxu0 %v511
      %v585 = vpop.f32.mrb[0].mxu0
      %v586 = vadd.f32 0.0, %v585
      %v587 = vpop.f32.mrb[0].mxu0
      %v588 = vadd.f32 0.0, %v587
      %589 = vdwg.mxu0
      %v590 = vadd.f32 %v492, %v586
      %v591 = vadd.f32 %v493, %v588
      %s592 = scalar_lea.vmem %s1, 16
      %v593 = vld [vmem:[%s592] sm:$0xf]
      %v595 = vsel %vm242, %v593, 0
      %v597 = vsel %vm246, %v196, 0
      %v599 = vsel %vm246, %v198, 0
      %601 = vmatprep.subr.mxu0 %v599
      %602 = vmatpush1.msra.mxu0 %v597
      %603 = vmatprep.subr.mxu0 0.0
      %604 = vmatpush1.msra.mxu0 0.0
      %605 = vmatprep.subr.mxu0 0.0
      %606 = vmatpush1.msra.mxu0 0.0
      %607 = vmatprep.subr.mxu0 0.0
      %608 = vmatpush1.msra.mxu0 0.0
      %609 = vmatprep.subr.mxu0 0.0
      %610 = vmatpush1.msra.mxu0 0.0
      %611 = vmatprep.subr.mxu0 0.0
      %612 = vmatpush1.msra.mxu0 0.0
      %613 = vmatprep.subr.mxu0 0.0
      %614 = vmatpush1.msra.mxu0 0.0
      %615 = vmatprep.subr.mxu0 0.0
      %616 = vmatpush1.msra.mxu0 0.0
      %617 = vmatprep.subr.mxu0 0.0
      %618 = vmatpush1.msra.mxu0 0.0
      %619 = vmatprep.subr.mxu0 0.0
      %620 = vmatpush1.msra.mxu0 0.0
      %621 = vmatprep.subr.mxu0 0.0
      %622 = vmatpush1.msra.mxu0 0.0
      %623 = vmatprep.subr.mxu0 0.0
      %624 = vmatpush1.msra.mxu0 0.0
      %625 = vmatprep.subr.mxu0 0.0
      %626 = vmatpush1.msra.mxu0 0.0
      %627 = vmatprep.subr.mxu0 0.0
      %628 = vmatpush1.msra.mxu0 0.0
      %629 = vmatprep.subr.mxu0 0.0
      %630 = vmatpush1.msra.mxu0 0.0
      %631 = vmatprep.subr.mxu0 0.0
      %632 = vmatpush1.msra.mxu0 0.0
      %633 = vmatprep.subr.mxu0 0.0
      %634 = vmatpush1.msra.mxu0 0.0
      %635 = vmatprep.subr.mxu0 0.0
      %636 = vmatpush1.msra.mxu0 0.0
      %637 = vmatprep.subr.mxu0 0.0
      %638 = vmatpush1.msra.mxu0 0.0
      %639 = vmatprep.subr.mxu0 0.0
      %640 = vmatpush1.msra.mxu0 0.0
      %641 = vmatprep.subr.mxu0 0.0
      %642 = vmatpush1.msra.mxu0 0.0
      %643 = vmatprep.subr.mxu0 0.0
      %644 = vmatpush1.msra.mxu0 0.0
      %645 = vmatprep.subr.mxu0 0.0
      %646 = vmatpush1.msra.mxu0 0.0
      %647 = vmatprep.subr.mxu0 0.0
      %648 = vmatpush1.msra.mxu0 0.0
      %649 = vmatprep.subr.mxu0 0.0
      %650 = vmatpush1.msra.mxu0 0.0
      %651 = vmatprep.subr.mxu0 0.0
      %652 = vmatpush1.msra.mxu0 0.0
      %653 = vmatprep.subr.mxu0 0.0
      %654 = vmatpush1.msra.mxu0 0.0
      %655 = vmatprep.subr.mxu0 0.0
      %656 = vmatpush1.msra.mxu0 0.0
      %657 = vmatprep.subr.mxu0 0.0
      %658 = vmatpush1.msra.mxu0 0.0
      %659 = vmatprep.subr.mxu0 0.0
      %660 = vmatpush1.msra.mxu0 0.0
      %661 = vmatprep.subr.mxu0 0.0
      %662 = vmatpush1.msra.mxu0 0.0
      %663 = vmatprep.subr.mxu0 0.0
      %664 = vmatpush1.msra.mxu0 0.0
      %665 = vmatprep.mubr.f32.mxu0 0.0
      %666 = vmatmul.mubr.f32.gmra.mrb[0].mxu0 %v595
      %v667 = vpop.f32.mrb[0].mxu0
      %v668 = vadd.f32 0.0, %v667
      %v669 = vpop.f32.mrb[0].mxu0
      %v670 = vadd.f32 0.0, %v669
      %671 = vdwg.mxu0
      %v672 = vadd.f32 %v590, %v668
      %v673 = vadd.f32 %v591, %v670
      %v674 = vsel %vm406, %v505, %v498
      %v675 = vsel %vm407, %v504, %v499
      %s676 = scalar_lea.vmem %s1, 28
      %v677 = vld [vmem:[%s676] sm:$0xf]
      %v679 = vsel %vm242, %v677, 0
      %v682 = vsel %vm246, %v674, 0
      %v685 = vsel %vm246, %v675, 0
      %687 = vmatprep.subr.mxu0 %v685
      %688 = vmatpush1.msra.mxu0 %v682
      %689 = vmatprep.subr.mxu0 0.0
      %690 = vmatpush1.msra.mxu0 0.0
      %691 = vmatprep.subr.mxu0 0.0
      %692 = vmatpush1.msra.mxu0 0.0
      %693 = vmatprep.subr.mxu0 0.0
      %694 = vmatpush1.msra.mxu0 0.0
      %695 = vmatprep.subr.mxu0 0.0
      %696 = vmatpush1.msra.mxu0 0.0
      %697 = vmatprep.subr.mxu0 0.0
      %698 = vmatpush1.msra.mxu0 0.0
      %699 = vmatprep.subr.mxu0 0.0
      %700 = vmatpush1.msra.mxu0 0.0
      %701 = vmatprep.subr.mxu0 0.0
      %702 = vmatpush1.msra.mxu0 0.0
      %703 = vmatprep.subr.mxu0 0.0
      %704 = vmatpush1.msra.mxu0 0.0
      %705 = vmatprep.subr.mxu0 0.0
      %706 = vmatpush1.msra.mxu0 0.0
      %707 = vmatprep.subr.mxu0 0.0
      %708 = vmatpush1.msra.mxu0 0.0
      %709 = vmatprep.subr.mxu0 0.0
      %710 = vmatpush1.msra.mxu0 0.0
      %711 = vmatprep.subr.mxu0 0.0
      %712 = vmatpush1.msra.mxu0 0.0
      %713 = vmatprep.subr.mxu0 0.0
      %714 = vmatpush1.msra.mxu0 0.0
      %715 = vmatprep.subr.mxu0 0.0
      %716 = vmatpush1.msra.mxu0 0.0
      %717 = vmatprep.subr.mxu0 0.0
      %718 = vmatpush1.msra.mxu0 0.0
      %719 = vmatprep.subr.mxu0 0.0
      %720 = vmatpush1.msra.mxu0 0.0
      %721 = vmatprep.subr.mxu0 0.0
      %722 = vmatpush1.msra.mxu0 0.0
      %723 = vmatprep.subr.mxu0 0.0
      %724 = vmatpush1.msra.mxu0 0.0
      %725 = vmatprep.subr.mxu0 0.0
      %726 = vmatpush1.msra.mxu0 0.0
      %727 = vmatprep.subr.mxu0 0.0
      %728 = vmatpush1.msra.mxu0 0.0
      %729 = vmatprep.subr.mxu0 0.0
      %730 = vmatpush1.msra.mxu0 0.0
      %731 = vmatprep.subr.mxu0 0.0
      %732 = vmatpush1.msra.mxu0 0.0
      %733 = vmatprep.subr.mxu0 0.0
      %734 = vmatpush1.msra.mxu0 0.0
      %735 = vmatprep.subr.mxu0 0.0
      %736 = vmatpush1.msra.mxu0 0.0
      %737 = vmatprep.subr.mxu0 0.0
      %738 = vmatpush1.msra.mxu0 0.0
      %739 = vmatprep.subr.mxu0 0.0
      %740 = vmatpush1.msra.mxu0 0.0
      %741 = vmatprep.subr.mxu0 0.0
      %742 = vmatpush1.msra.mxu0 0.0
      %743 = vmatprep.subr.mxu0 0.0
      %744 = vmatpush1.msra.mxu0 0.0
      %745 = vmatprep.subr.mxu0 0.0
      %746 = vmatpush1.msra.mxu0 0.0
      %747 = vmatprep.subr.mxu0 0.0
      %748 = vmatpush1.msra.mxu0 0.0
      %749 = vmatprep.subr.mxu0 0.0
      %750 = vmatpush1.msra.mxu0 0.0
      %751 = vmatprep.mubr.f32.mxu0 0.0
      %752 = vmatmul.mubr.f32.gmra.mrb[0].mxu0 %v679
      %v753 = vpop.f32.mrb[0].mxu0
      %v754 = vadd.f32 0.0, %v753
      %v755 = vpop.f32.mrb[0].mxu0
      %v756 = vadd.f32 0.0, %v755
      %757 = vdwg.mxu0
      %v758 = vadd.f32 %v672, %v754
      %v759 = vadd.f32 %v673, %v756
      %v760 = vsel %vm190, 1, 0
      %v761 = vsel %vm191, 1, 0
      %vm762 = vcmp.eq.s32.totalorder %v760, 1
      %vm763 = vcmp.eq.s32.totalorder %v761, 1
      %v764 = vsel %vm762, %v213, %v205
      %v765 = vsel %vm763, %v212, %v206
      %766 = vrot.lane.b32.xlu0 %v764, 112
      %v767 = vpop.permute.xlu0 %766
      %768 = vrot.lane.b32.xlu0 %v765, 112
      %v769 = vpop.permute.xlu0 %768
      %v770 = vsel %vm224, %v767, %v769
      %v771 = vsel %vm224, %v769, %v767
      %772 = vrot.lane.b32.xlu0 %v764, 16
      %v773 = vpop.permute.xlu0 %772
      %774 = vrot.lane.b32.xlu0 %v765, 16
      %v775 = vpop.permute.xlu0 %774
      %v776 = vsel %vm192, %v773, %v775
      %v777 = vsel %vm192, %v775, %v773
      %v778 = vsel %vm235, %v770, %v777
      %v779 = vsel %vm236, %v771, %v776
      %s780 = scalar_lea.vmem %s1, 8
      %v781 = vld [vmem:[%s780] sm:$0xf]
      %v783 = vsel %vm242, %v781, 0
      %v786 = vsel %vm246, %v778, 0
      %v789 = vsel %vm246, %v779, 0
      %791 = vmatprep.subr.mxu0 %v789
      %792 = vmatpush1.msra.mxu0 %v786
      %793 = vmatprep.subr.mxu0 0.0
      %794 = vmatpush1.msra.mxu0 0.0
      %795 = vmatprep.subr.mxu0 0.0
      %796 = vmatpush1.msra.mxu0 0.0
      %797 = vmatprep.subr.mxu0 0.0
      %798 = vmatpush1.msra.mxu0 0.0
      %799 = vmatprep.subr.mxu0 0.0
      %800 = vmatpush1.msra.mxu0 0.0
      %801 = vmatprep.subr.mxu0 0.0
      %802 = vmatpush1.msra.mxu0 0.0
      %803 = vmatprep.subr.mxu0 0.0
      %804 = vmatpush1.msra.mxu0 0.0
      %805 = vmatprep.subr.mxu0 0.0
      %806 = vmatpush1.msra.mxu0 0.0
      %807 = vmatprep.subr.mxu0 0.0
      %808 = vmatpush1.msra.mxu0 0.0
      %809 = vmatprep.subr.mxu0 0.0
      %810 = vmatpush1.msra.mxu0 0.0
      %811 = vmatprep.subr.mxu0 0.0
      %812 = vmatpush1.msra.mxu0 0.0
      %813 = vmatprep.subr.mxu0 0.0
      %814 = vmatpush1.msra.mxu0 0.0
      %815 = vmatprep.subr.mxu0 0.0
      %816 = vmatpush1.msra.mxu0 0.0
      %817 = vmatprep.subr.mxu0 0.0
      %818 = vmatpush1.msra.mxu0 0.0
      %819 = vmatprep.subr.mxu0 0.0
      %820 = vmatpush1.msra.mxu0 0.0
      %821 = vmatprep.subr.mxu0 0.0
      %822 = vmatpush1.msra.mxu0 0.0
      %823 = vmatprep.subr.mxu0 0.0
      %824 = vmatpush1.msra.mxu0 0.0
      %825 = vmatprep.subr.mxu0 0.0
      %826 = vmatpush1.msra.mxu0 0.0
      %827 = vmatprep.subr.mxu0 0.0
      %828 = vmatpush1.msra.mxu0 0.0
      %829 = vmatprep.subr.mxu0 0.0
      %830 = vmatpush1.msra.mxu0 0.0
      %831 = vmatprep.subr.mxu0 0.0
      %832 = vmatpush1.msra.mxu0 0.0
      %833 = vmatprep.subr.mxu0 0.0
      %834 = vmatpush1.msra.mxu0 0.0
      %835 = vmatprep.subr.mxu0 0.0
      %836 = vmatpush1.msra.mxu0 0.0
      %837 = vmatprep.subr.mxu0 0.0
      %838 = vmatpush1.msra.mxu0 0.0
      %839 = vmatprep.subr.mxu0 0.0
      %840 = vmatpush1.msra.mxu0 0.0
      %841 = vmatprep.subr.mxu0 0.0
      %842 = vmatpush1.msra.mxu0 0.0
      %843 = vmatprep.subr.mxu0 0.0
      %844 = vmatpush1.msra.mxu0 0.0
      %845 = vmatprep.subr.mxu0 0.0
      %846 = vmatpush1.msra.mxu0 0.0
      %847 = vmatprep.subr.mxu0 0.0
      %848 = vmatpush1.msra.mxu0 0.0
      %849 = vmatprep.subr.mxu0 0.0
      %850 = vmatpush1.msra.mxu0 0.0
      %851 = vmatprep.subr.mxu0 0.0
      %852 = vmatpush1.msra.mxu0 0.0
      %853 = vmatprep.subr.mxu0 0.0
      %854 = vmatpush1.msra.mxu0 0.0
      %855 = vmatprep.mubr.f32.mxu0 0.0
      %856 = vmatmul.mubr.f32.gmra.mrb[0].mxu0 %v783
      %v857 = vpop.f32.mrb[0].mxu0
      %v858 = vadd.f32 0.0, %v857
      %v859 = vpop.f32.mrb[0].mxu0
      %v860 = vadd.f32 0.0, %v859
      %861 = vdwg.mxu0
      %v862 = vadd.f32 %v758, %v858
      %v863 = vadd.f32 %v759, %v860
      %s864 = scalar_lea.vmem %s1, 20
      %v865 = vld [vmem:[%s864] sm:$0xf]
      %v867 = vsel %vm242, %v865, 0
      %v870 = vsel %vm246, %v764, 0
      %v873 = vsel %vm246, %v765, 0
      %875 = vmatprep.subr.mxu0 %v873
      %876 = vmatpush1.msra.mxu0 %v870
      %877 = vmatprep.subr.mxu0 0.0
      %878 = vmatpush1.msra.mxu0 0.0
      %879 = vmatprep.subr.mxu0 0.0
      %880 = vmatpush1.msra.mxu0 0.0
      %881 = vmatprep.subr.mxu0 0.0
      %882 = vmatpush1.msra.mxu0 0.0
      %883 = vmatprep.subr.mxu0 0.0
      %884 = vmatpush1.msra.mxu0 0.0
      %885 = vmatprep.subr.mxu0 0.0
      %886 = vmatpush1.msra.mxu0 0.0
      %887 = vmatprep.subr.mxu0 0.0
      %888 = vmatpush1.msra.mxu0 0.0
      %889 = vmatprep.subr.mxu0 0.0
      %890 = vmatpush1.msra.mxu0 0.0
      %891 = vmatprep.subr.mxu0 0.0
      %892 = vmatpush1.msra.mxu0 0.0
      %893 = vmatprep.subr.mxu0 0.0
      %894 = vmatpush1.msra.mxu0 0.0
      %895 = vmatprep.subr.mxu0 0.0
      %896 = vmatpush1.msra.mxu0 0.0
      %897 = vmatprep.subr.mxu0 0.0
      %898 = vmatpush1.msra.mxu0 0.0
      %899 = vmatprep.subr.mxu0 0.0
      %900 = vmatpush1.msra.mxu0 0.0
      %901 = vmatprep.subr.mxu0 0.0
      %902 = vmatpush1.msra.mxu0 0.0
      %903 = vmatprep.subr.mxu0 0.0
      %904 = vmatpush1.msra.mxu0 0.0
      %905 = vmatprep.subr.mxu0 0.0
      %906 = vmatpush1.msra.mxu0 0.0
      %907 = vmatprep.subr.mxu0 0.0
      %908 = vmatpush1.msra.mxu0 0.0
      %909 = vmatprep.subr.mxu0 0.0
      %910 = vmatpush1.msra.mxu0 0.0
      %911 = vmatprep.subr.mxu0 0.0
      %912 = vmatpush1.msra.mxu0 0.0
      %913 = vmatprep.subr.mxu0 0.0
      %914 = vmatpush1.msra.mxu0 0.0
      %915 = vmatprep.subr.mxu0 0.0
      %916 = vmatpush1.msra.mxu0 0.0
      %917 = vmatprep.subr.mxu0 0.0
      %918 = vmatpush1.msra.mxu0 0.0
      %919 = vmatprep.subr.mxu0 0.0
      %920 = vmatpush1.msra.mxu0 0.0
      %921 = vmatprep.subr.mxu0 0.0
      %922 = vmatpush1.msra.mxu0 0.0
      %923 = vmatprep.subr.mxu0 0.0
      %924 = vmatpush1.msra.mxu0 0.0
      %925 = vmatprep.subr.mxu0 0.0
      %926 = vmatpush1.msra.mxu0 0.0
      %927 = vmatprep.subr.mxu0 0.0
      %928 = vmatpush1.msra.mxu0 0.0
      %929 = vmatprep.subr.mxu0 0.0
      %930 = vmatpush1.msra.mxu0 0.0
      %931 = vmatprep.subr.mxu0 0.0
      %932 = vmatpush1.msra.mxu0 0.0
      %933 = vmatprep.subr.mxu0 0.0
      %934 = vmatpush1.msra.mxu0 0.0
      %935 = vmatprep.subr.mxu0 0.0
      %936 = vmatpush1.msra.mxu0 0.0
      %937 = vmatprep.subr.mxu0 0.0
      %938 = vmatpush1.msra.mxu0 0.0
      %939 = vmatprep.mubr.f32.mxu0 0.0
      %940 = vmatmul.mubr.f32.gmra.mrb[0].mxu0 %v867
      %v941 = vpop.f32.mrb[0].mxu0
      %v942 = vadd.f32 0.0, %v941
      %v943 = vpop.f32.mrb[0].mxu0
      %v944 = vadd.f32 0.0, %v943
      %945 = vdwg.mxu0
      %v946 = vadd.f32 %v862, %v942
      %v947 = vadd.f32 %v863, %v944
      %v948 = vsel %vm406, %v777, %v770
      %v949 = vsel %vm407, %v776, %v771
      %s950 = scalar_lea.vmem %s1, 32
      %v951 = vld [vmem:[%s950] sm:$0xf]
      %v953 = vsel %vm242, %v951, 0
      %v956 = vsel %vm246, %v948, 0
      %v959 = vsel %vm246, %v949, 0
      %961 = vmatprep.subr.mxu0 %v959
      %962 = vmatpush1.msra.mxu0 %v956
      %963 = vmatprep.subr.mxu0 0.0
      %964 = vmatpush1.msra.mxu0 0.0
      %965 = vmatprep.subr.mxu0 0.0
      %966 = vmatpush1.msra.mxu0 0.0
      %967 = vmatprep.subr.mxu0 0.0
      %968 = vmatpush1.msra.mxu0 0.0
      %969 = vmatprep.subr.mxu0 0.0
      %970 = vmatpush1.msra.mxu0 0.0
      %971 = vmatprep.subr.mxu0 0.0
      %972 = vmatpush1.msra.mxu0 0.0
      %973 = vmatprep.subr.mxu0 0.0
      %974 = vmatpush1.msra.mxu0 0.0
      %975 = vmatprep.subr.mxu0 0.0
      %976 = vmatpush1.msra.mxu0 0.0
      %977 = vmatprep.subr.mxu0 0.0
      %978 = vmatpush1.msra.mxu0 0.0
      %979 = vmatprep.subr.mxu0 0.0
      %980 = vmatpush1.msra.mxu0 0.0
      %981 = vmatprep.subr.mxu0 0.0
      %982 = vmatpush1.msra.mxu0 0.0
      %983 = vmatprep.subr.mxu0 0.0
      %984 = vmatpush1.msra.mxu0 0.0
      %985 = vmatprep.subr.mxu0 0.0
      %986 = vmatpush1.msra.mxu0 0.0
      %987 = vmatprep.subr.mxu0 0.0
      %988 = vmatpush1.msra.mxu0 0.0
      %989 = vmatprep.subr.mxu0 0.0
      %990 = vmatpush1.msra.mxu0 0.0
      %991 = vmatprep.subr.mxu0 0.0
      %992 = vmatpush1.msra.mxu0 0.0
      %993 = vmatprep.subr.mxu0 0.0
      %994 = vmatpush1.msra.mxu0 0.0
      %995 = vmatprep.subr.mxu0 0.0
      %996 = vmatpush1.msra.mxu0 0.0
      %997 = vmatprep.subr.mxu0 0.0
      %998 = vmatpush1.msra.mxu0 0.0
      %999 = vmatprep.subr.mxu0 0.0
      %1000 = vmatpush1.msra.mxu0 0.0
      %1001 = vmatprep.subr.mxu0 0.0
      %1002 = vmatpush1.msra.mxu0 0.0
      %1003 = vmatprep.subr.mxu0 0.0
      %1004 = vmatpush1.msra.mxu0 0.0
      %1005 = vmatprep.subr.mxu0 0.0
      %1006 = vmatpush1.msra.mxu0 0.0
      %1007 = vmatprep.subr.mxu0 0.0
      %1008 = vmatpush1.msra.mxu0 0.0
      %1009 = vmatprep.subr.mxu0 0.0
      %1010 = vmatpush1.msra.mxu0 0.0
      %1011 = vmatprep.subr.mxu0 0.0
      %1012 = vmatpush1.msra.mxu0 0.0
      %1013 = vmatprep.subr.mxu0 0.0
      %1014 = vmatpush1.msra.mxu0 0.0
      %1015 = vmatprep.subr.mxu0 0.0
      %1016 = vmatpush1.msra.mxu0 0.0
      %1017 = vmatprep.subr.mxu0 0.0
      %1018 = vmatpush1.msra.mxu0 0.0
      %1019 = vmatprep.subr.mxu0 0.0
      %1020 = vmatpush1.msra.mxu0 0.0
      %1021 = vmatprep.subr.mxu0 0.0
      %1022 = vmatpush1.msra.mxu0 0.0
      %1023 = vmatprep.subr.mxu0 0.0
      %1024 = vmatpush1.msra.mxu0 0.0
      %1025 = vmatprep.mubr.f32.mxu0 0.0
      %1026 = vmatmul.mubr.f32.gmra.mrb[0].mxu0 %v953
      %v1027 = vpop.f32.mrb[0].mxu0
      %v1028 = vadd.f32 0.0, %v1027
      %v1029 = vpop.f32.mrb[0].mxu0
      %v1030 = vadd.f32 0.0, %v1029
      %1031 = vdwg.mxu0
      %v1032 = vadd.f32 %v946, %v1028
      %v1033 = vadd.f32 %v947, %v1030
      %v1034 = vsel %vm246, %v1032, 0.0
      %v1035 = vsel %vm246, %v1033, 0.0
      %v1036 = vadd.f32 %v1034, %v1035
      %1037 = vadd.xlane.f32.xlu0 %v1036
      %v1038 = vpop.xlane.xlu0 %1037
      %v1039 = vrcp.pop 256.0
      %v1040 = vmul.f32 %v1038, %v1039
      %v1041 = vsub.f32 %v1032, %v1040
      %v1042 = vsub.f32 %v1033, %v1040
      %v1043 = vmul.f32 %v1041, %v1041
      %v1044 = vmul.f32 %v1042, %v1042
      %v1045 = vsel %vm246, %v1043, 0.0
      %v1046 = vsel %vm246, %v1044, 0.0
      %v1047 = vadd.f32 %v1045, %v1046
      %1048 = vadd.xlane.f32.xlu0 %v1047
      %v1049 = vpop.xlane.xlu0 %1048
      %v1050 = vmul.f32 %v1049, %v1039
      %v1051 = vadd.f32 %v1050, 1e-05
      %v1052 = vrsqrt.pop %v1051
      %v1053 = vmul.f32 %v1041, %v1052
      %v1054 = vmul.f32 %v1042, %v1052
      %v1055 = vmax.f32 %v1053, 0.0
      %v1056 = vmax.f32 %v1054, 0.0
      %1057 = vrot.lane.b32.xlu0 %v1055, 127
      %v1058 = vpop.permute.xlu0 %1057
      %1059 = vrot.lane.b32.xlu0 %v1056, 127
      %v1060 = vpop.permute.xlu0 %1059
      %v1061 = vsel %vm204, %v1058, %v1060
      %v1062 = vsel %vm204, %v1060, %v1058
      %1063 = vrot.lane.b32.xlu0 %v1055, 1
      %v1064 = vpop.permute.xlu0 %1063
      %1065 = vrot.lane.b32.xlu0 %v1056, 1
      %v1066 = vpop.permute.xlu0 %1065
      %v1067 = vsel %vm211, %v1064, %v1066
      %v1068 = vsel %vm211, %v1066, %v1064
      %v1069 = vsel %vm216, %v1061, %v1068
      %v1070 = vsel %vm217, %v1062, %v1067
      %1071 = vrot.lane.b32.xlu0 %v1069, 112
      %v1072 = vpop.permute.xlu0 %1071
      %1073 = vrot.lane.b32.xlu0 %v1070, 112
      %v1074 = vpop.permute.xlu0 %1073
      %v1075 = vsel %vm224, %v1072, %v1074
      %v1076 = vsel %vm224, %v1074, %v1072
      %1077 = vrot.lane.b32.xlu0 %v1069, 16
      %v1078 = vpop.permute.xlu0 %1077
      %1079 = vrot.lane.b32.xlu0 %v1070, 16
      %v1080 = vpop.permute.xlu0 %1079
      %v1081 = vsel %vm192, %v1078, %v1080
      %v1082 = vsel %vm192, %v1080, %v1078
      %v1083 = vsel %vm235, %v1075, %v1082
      %v1084 = vsel %vm236, %v1076, %v1081
      %v1085 = vld [vmem:[%s2] sm:$0xf]
      %s1086 = scalar_lea.vmem %s2, 12
      %v1087 = vld [vmem:[%s1086] sm:$0xf]
      %v1089 = vsel %vm242, %v1087, 0
      %v1092 = vsel %vm246, %v1069, 0
      %v1095 = vsel %vm246, %v1070, 0
      %1097 = vmatprep.subr.mxu0 %v1095
      %1098 = vmatpush1.msra.mxu0 %v1092
      %1099 = vmatprep.subr.mxu0 0.0
      %1100 = vmatpush1.msra.mxu0 0.0
      %1101 = vmatprep.subr.mxu0 0.0
      %1102 = vmatpush1.msra.mxu0 0.0
      %1103 = vmatprep.subr.mxu0 0.0
      %1104 = vmatpush1.msra.mxu0 0.0
      %1105 = vmatprep.subr.mxu0 0.0
      %1106 = vmatpush1.msra.mxu0 0.0
      %1107 = vmatprep.subr.mxu0 0.0
      %1108 = vmatpush1.msra.mxu0 0.0
      %1109 = vmatprep.subr.mxu0 0.0
      %1110 = vmatpush1.msra.mxu0 0.0
      %1111 = vmatprep.subr.mxu0 0.0
      %1112 = vmatpush1.msra.mxu0 0.0
      %1113 = vmatprep.subr.mxu0 0.0
      %1114 = vmatpush1.msra.mxu0 0.0
      %1115 = vmatprep.subr.mxu0 0.0
      %1116 = vmatpush1.msra.mxu0 0.0
      %1117 = vmatprep.subr.mxu0 0.0
      %1118 = vmatpush1.msra.mxu0 0.0
      %1119 = vmatprep.subr.mxu0 0.0
      %1120 = vmatpush1.msra.mxu0 0.0
      %1121 = vmatprep.subr.mxu0 0.0
      %1122 = vmatpush1.msra.mxu0 0.0
      %1123 = vmatprep.subr.mxu0 0.0
      %1124 = vmatpush1.msra.mxu0 0.0
      %1125 = vmatprep.subr.mxu0 0.0
      %1126 = vmatpush1.msra.mxu0 0.0
      %1127 = vmatprep.subr.mxu0 0.0
      %1128 = vmatpush1.msra.mxu0 0.0
      %1129 = vmatprep.subr.mxu0 0.0
      %1130 = vmatpush1.msra.mxu0 0.0
      %1131 = vmatprep.subr.mxu0 0.0
      %1132 = vmatpush1.msra.mxu0 0.0
      %1133 = vmatprep.subr.mxu0 0.0
      %1134 = vmatpush1.msra.mxu0 0.0
      %1135 = vmatprep.subr.mxu0 0.0
      %1136 = vmatpush1.msra.mxu0 0.0
      %1137 = vmatprep.subr.mxu0 0.0
      %1138 = vmatpush1.msra.mxu0 0.0
      %1139 = vmatprep.subr.mxu0 0.0
      %1140 = vmatpush1.msra.mxu0 0.0
      %1141 = vmatprep.subr.mxu0 0.0
      %1142 = vmatpush1.msra.mxu0 0.0
      %1143 = vmatprep.subr.mxu0 0.0
      %1144 = vmatpush1.msra.mxu0 0.0
      %1145 = vmatprep.subr.mxu0 0.0
      %1146 = vmatpush1.msra.mxu0 0.0
      %1147 = vmatprep.subr.mxu0 0.0
      %1148 = vmatpush1.msra.mxu0 0.0
      %1149 = vmatprep.subr.mxu0 0.0
      %1150 = vmatpush1.msra.mxu0 0.0
      %1151 = vmatprep.subr.mxu0 0.0
      %1152 = vmatpush1.msra.mxu0 0.0
      %1153 = vmatprep.subr.mxu0 0.0
      %1154 = vmatpush1.msra.mxu0 0.0
      %1155 = vmatprep.subr.mxu0 0.0
      %1156 = vmatpush1.msra.mxu0 0.0
      %1157 = vmatprep.subr.mxu0 0.0
      %1158 = vmatpush1.msra.mxu0 0.0
      %1159 = vmatprep.subr.mxu0 0.0
      %1160 = vmatpush1.msra.mxu0 0.0
      %1161 = vmatprep.mubr.f32.mxu0 0.0
      %1162 = vmatmul.mubr.f32.gmra.mrb[0].mxu0 %v1089
      %v1163 = vpop.f32.mrb[0].mxu0
      %v1164 = vadd.f32 0.0, %v1163
      %v1165 = vpop.f32.mrb[0].mxu0
      %v1166 = vadd.f32 0.0, %v1165
      %1167 = vdwg.mxu0
      %v1169 = vsel %vm242, %v1085, 0
      %v1172 = vsel %vm246, %v1083, 0
      %v1175 = vsel %vm246, %v1084, 0
      %1177 = vmatprep.subr.mxu0 %v1175
      %1178 = vmatpush1.msra.mxu0 %v1172
      %1179 = vmatprep.subr.mxu0 0.0
      %1180 = vmatpush1.msra.mxu0 0.0
      %1181 = vmatprep.subr.mxu0 0.0
      %1182 = vmatpush1.msra.mxu0 0.0
      %1183 = vmatprep.subr.mxu0 0.0
      %1184 = vmatpush1.msra.mxu0 0.0
      %1185 = vmatprep.subr.mxu0 0.0
      %1186 = vmatpush1.msra.mxu0 0.0
      %1187 = vmatprep.subr.mxu0 0.0
      %1188 = vmatpush1.msra.mxu0 0.0
      %1189 = vmatprep.subr.mxu0 0.0
      %1190 = vmatpush1.msra.mxu0 0.0
      %1191 = vmatprep.subr.mxu0 0.0
      %1192 = vmatpush1.msra.mxu0 0.0
      %1193 = vmatprep.subr.mxu0 0.0
      %1194 = vmatpush1.msra.mxu0 0.0
      %1195 = vmatprep.subr.mxu0 0.0
      %1196 = vmatpush1.msra.mxu0 0.0
      %1197 = vmatprep.subr.mxu0 0.0
      %1198 = vmatpush1.msra.mxu0 0.0
      %1199 = vmatprep.subr.mxu0 0.0
      %1200 = vmatpush1.msra.mxu0 0.0
      %1201 = vmatprep.subr.mxu0 0.0
      %1202 = vmatpush1.msra.mxu0 0.0
      %1203 = vmatprep.subr.mxu0 0.0
      %1204 = vmatpush1.msra.mxu0 0.0
      %1205 = vmatprep.subr.mxu0 0.0
      %1206 = vmatpush1.msra.mxu0 0.0
      %1207 = vmatprep.subr.mxu0 0.0
      %1208 = vmatpush1.msra.mxu0 0.0
      %1209 = vmatprep.subr.mxu0 0.0
      %1210 = vmatpush1.msra.mxu0 0.0
      %1211 = vmatprep.subr.mxu0 0.0
      %1212 = vmatpush1.msra.mxu0 0.0
      %1213 = vmatprep.subr.mxu0 0.0
      %1214 = vmatpush1.msra.mxu0 0.0
      %1215 = vmatprep.subr.mxu0 0.0
      %1216 = vmatpush1.msra.mxu0 0.0
      %1217 = vmatprep.subr.mxu0 0.0
      %1218 = vmatpush1.msra.mxu0 0.0
      %1219 = vmatprep.subr.mxu0 0.0
      %1220 = vmatpush1.msra.mxu0 0.0
      %1221 = vmatprep.subr.mxu0 0.0
      %1222 = vmatpush1.msra.mxu0 0.0
      %1223 = vmatprep.subr.mxu0 0.0
      %1224 = vmatpush1.msra.mxu0 0.0
      %1225 = vmatprep.subr.mxu0 0.0
      %1226 = vmatpush1.msra.mxu0 0.0
      %1227 = vmatprep.subr.mxu0 0.0
      %1228 = vmatpush1.msra.mxu0 0.0
      %1229 = vmatprep.subr.mxu0 0.0
      %1230 = vmatpush1.msra.mxu0 0.0
      %1231 = vmatprep.subr.mxu0 0.0
      %1232 = vmatpush1.msra.mxu0 0.0
      %1233 = vmatprep.subr.mxu0 0.0
      %1234 = vmatpush1.msra.mxu0 0.0
      %1235 = vmatprep.subr.mxu0 0.0
      %1236 = vmatpush1.msra.mxu0 0.0
      %1237 = vmatprep.subr.mxu0 0.0
      %1238 = vmatpush1.msra.mxu0 0.0
      %1239 = vmatprep.subr.mxu0 0.0
      %1240 = vmatpush1.msra.mxu0 0.0
      %1241 = vmatprep.mubr.f32.mxu0 0.0
      %1242 = vmatmul.mubr.f32.gmra.mrb[0].mxu0 %v1169
      %v1243 = vpop.f32.mrb[0].mxu0
      %v1244 = vadd.f32 %v1164, %v1243
      %v1245 = vpop.f32.mrb[0].mxu0
      %v1246 = vadd.f32 %v1166, %v1245
      %1247 = vdwg.mxu0
      %v1248 = vsel %vm406, %v1082, %v1075
      %v1249 = vsel %vm407, %v1081, %v1076
      %s1250 = scalar_lea.vmem %s2, 24
      %v1251 = vld [vmem:[%s1250] sm:$0xf]
      %v1253 = vsel %vm242, %v1251, 0
      %v1256 = vsel %vm246, %v1248, 0
      %v1259 = vsel %vm246, %v1249, 0
      %1261 = vmatprep.subr.mxu0 %v1259
      %1262 = vmatpush1.msra.mxu0 %v1256
      %1263 = vmatprep.subr.mxu0 0.0
      %1264 = vmatpush1.msra.mxu0 0.0
      %1265 = vmatprep.subr.mxu0 0.0
      %1266 = vmatpush1.msra.mxu0 0.0
      %1267 = vmatprep.subr.mxu0 0.0
      %1268 = vmatpush1.msra.mxu0 0.0
      %1269 = vmatprep.subr.mxu0 0.0
      %1270 = vmatpush1.msra.mxu0 0.0
      %1271 = vmatprep.subr.mxu0 0.0
      %1272 = vmatpush1.msra.mxu0 0.0
      %1273 = vmatprep.subr.mxu0 0.0
      %1274 = vmatpush1.msra.mxu0 0.0
      %1275 = vmatprep.subr.mxu0 0.0
      %1276 = vmatpush1.msra.mxu0 0.0
      %1277 = vmatprep.subr.mxu0 0.0
      %1278 = vmatpush1.msra.mxu0 0.0
      %1279 = vmatprep.subr.mxu0 0.0
      %1280 = vmatpush1.msra.mxu0 0.0
      %1281 = vmatprep.subr.mxu0 0.0
      %1282 = vmatpush1.msra.mxu0 0.0
      %1283 = vmatprep.subr.mxu0 0.0
      %1284 = vmatpush1.msra.mxu0 0.0
      %1285 = vmatprep.subr.mxu0 0.0
      %1286 = vmatpush1.msra.mxu0 0.0
      %1287 = vmatprep.subr.mxu0 0.0
      %1288 = vmatpush1.msra.mxu0 0.0
      %1289 = vmatprep.subr.mxu0 0.0
      %1290 = vmatpush1.msra.mxu0 0.0
      %1291 = vmatprep.subr.mxu0 0.0
      %1292 = vmatpush1.msra.mxu0 0.0
      %1293 = vmatprep.subr.mxu0 0.0
      %1294 = vmatpush1.msra.mxu0 0.0
      %1295 = vmatprep.subr.mxu0 0.0
      %1296 = vmatpush1.msra.mxu0 0.0
      %1297 = vmatprep.subr.mxu0 0.0
      %1298 = vmatpush1.msra.mxu0 0.0
      %1299 = vmatprep.subr.mxu0 0.0
      %1300 = vmatpush1.msra.mxu0 0.0
      %1301 = vmatprep.subr.mxu0 0.0
      %1302 = vmatpush1.msra.mxu0 0.0
      %1303 = vmatprep.subr.mxu0 0.0
      %1304 = vmatpush1.msra.mxu0 0.0
      %1305 = vmatprep.subr.mxu0 0.0
      %1306 = vmatpush1.msra.mxu0 0.0
      %1307 = vmatprep.subr.mxu0 0.0
      %1308 = vmatpush1.msra.mxu0 0.0
      %1309 = vmatprep.subr.mxu0 0.0
      %1310 = vmatpush1.msra.mxu0 0.0
      %1311 = vmatprep.subr.mxu0 0.0
      %1312 = vmatpush1.msra.mxu0 0.0
      %1313 = vmatprep.subr.mxu0 0.0
      %1314 = vmatpush1.msra.mxu0 0.0
      %1315 = vmatprep.subr.mxu0 0.0
      %1316 = vmatpush1.msra.mxu0 0.0
      %1317 = vmatprep.subr.mxu0 0.0
      %1318 = vmatpush1.msra.mxu0 0.0
      %1319 = vmatprep.subr.mxu0 0.0
      %1320 = vmatpush1.msra.mxu0 0.0
      %1321 = vmatprep.subr.mxu0 0.0
      %1322 = vmatpush1.msra.mxu0 0.0
      %1323 = vmatprep.subr.mxu0 0.0
      %1324 = vmatpush1.msra.mxu0 0.0
      %1325 = vmatprep.mubr.f32.mxu0 0.0
      %1326 = vmatmul.mubr.f32.gmra.mrb[0].mxu0 %v1253
      %v1327 = vpop.f32.mrb[0].mxu0
      %v1328 = vadd.f32 0.0, %v1327
      %v1329 = vpop.f32.mrb[0].mxu0
      %v1330 = vadd.f32 0.0, %v1329
      %1331 = vdwg.mxu0
      %v1332 = vadd.f32 %v1244, %v1328
      %v1333 = vadd.f32 %v1246, %v1330
      %1334 = vrot.lane.b32.xlu0 %v1055, 112
      %v1335 = vpop.permute.xlu0 %1334
      %1336 = vrot.lane.b32.xlu0 %v1056, 112
      %v1337 = vpop.permute.xlu0 %1336
      %v1338 = vsel %vm224, %v1335, %v1337
      %v1339 = vsel %vm224, %v1337, %v1335
      %1340 = vrot.lane.b32.xlu0 %v1055, 16
      %v1341 = vpop.permute.xlu0 %1340
      %1342 = vrot.lane.b32.xlu0 %v1056, 16
      %v1343 = vpop.permute.xlu0 %1342
      %v1344 = vsel %vm192, %v1341, %v1343
      %v1345 = vsel %vm192, %v1343, %v1341
      %v1346 = vsel %vm235, %v1338, %v1345
      %v1347 = vsel %vm236, %v1339, %v1344
      %s1348 = scalar_lea.vmem %s2, 4
      %v1349 = vld [vmem:[%s1348] sm:$0xf]
      %v1351 = vsel %vm242, %v1349, 0
      %v1354 = vsel %vm246, %v1346, 0
      %v1357 = vsel %vm246, %v1347, 0
      %1359 = vmatprep.subr.mxu0 %v1357
      %1360 = vmatpush1.msra.mxu0 %v1354
      %1361 = vmatprep.subr.mxu0 0.0
      %1362 = vmatpush1.msra.mxu0 0.0
      %1363 = vmatprep.subr.mxu0 0.0
      %1364 = vmatpush1.msra.mxu0 0.0
      %1365 = vmatprep.subr.mxu0 0.0
      %1366 = vmatpush1.msra.mxu0 0.0
      %1367 = vmatprep.subr.mxu0 0.0
      %1368 = vmatpush1.msra.mxu0 0.0
      %1369 = vmatprep.subr.mxu0 0.0
      %1370 = vmatpush1.msra.mxu0 0.0
      %1371 = vmatprep.subr.mxu0 0.0
      %1372 = vmatpush1.msra.mxu0 0.0
      %1373 = vmatprep.subr.mxu0 0.0
      %1374 = vmatpush1.msra.mxu0 0.0
      %1375 = vmatprep.subr.mxu0 0.0
      %1376 = vmatpush1.msra.mxu0 0.0
      %1377 = vmatprep.subr.mxu0 0.0
      %1378 = vmatpush1.msra.mxu0 0.0
      %1379 = vmatprep.subr.mxu0 0.0
      %1380 = vmatpush1.msra.mxu0 0.0
      %1381 = vmatprep.subr.mxu0 0.0
      %1382 = vmatpush1.msra.mxu0 0.0
      %1383 = vmatprep.subr.mxu0 0.0
      %1384 = vmatpush1.msra.mxu0 0.0
      %1385 = vmatprep.subr.mxu0 0.0
      %1386 = vmatpush1.msra.mxu0 0.0
      %1387 = vmatprep.subr.mxu0 0.0
      %1388 = vmatpush1.msra.mxu0 0.0
      %1389 = vmatprep.subr.mxu0 0.0
      %1390 = vmatpush1.msra.mxu0 0.0
      %1391 = vmatprep.subr.mxu0 0.0
      %1392 = vmatpush1.msra.mxu0 0.0
      %1393 = vmatprep.subr.mxu0 0.0
      %1394 = vmatpush1.msra.mxu0 0.0
      %1395 = vmatprep.subr.mxu0 0.0
      %1396 = vmatpush1.msra.mxu0 0.0
      %1397 = vmatprep.subr.mxu0 0.0
      %1398 = vmatpush1.msra.mxu0 0.0
      %1399 = vmatprep.subr.mxu0 0.0
      %1400 = vmatpush1.msra.mxu0 0.0
      %1401 = vmatprep.subr.mxu0 0.0
      %1402 = vmatpush1.msra.mxu0 0.0
      %1403 = vmatprep.subr.mxu0 0.0
      %1404 = vmatpush1.msra.mxu0 0.0
      %1405 = vmatprep.subr.mxu0 0.0
      %1406 = vmatpush1.msra.mxu0 0.0
      %1407 = vmatprep.subr.mxu0 0.0
      %1408 = vmatpush1.msra.mxu0 0.0
      %1409 = vmatprep.subr.mxu0 0.0
      %1410 = vmatpush1.msra.mxu0 0.0
      %1411 = vmatprep.subr.mxu0 0.0
      %1412 = vmatpush1.msra.mxu0 0.0
      %1413 = vmatprep.subr.mxu0 0.0
      %1414 = vmatpush1.msra.mxu0 0.0
      %1415 = vmatprep.subr.mxu0 0.0
      %1416 = vmatpush1.msra.mxu0 0.0
      %1417 = vmatprep.subr.mxu0 0.0
      %1418 = vmatpush1.msra.mxu0 0.0
      %1419 = vmatprep.subr.mxu0 0.0
      %1420 = vmatpush1.msra.mxu0 0.0
      %1421 = vmatprep.subr.mxu0 0.0
      %1422 = vmatpush1.msra.mxu0 0.0
      %1423 = vmatprep.mubr.f32.mxu0 0.0
      %1424 = vmatmul.mubr.f32.gmra.mrb[0].mxu0 %v1351
      %v1425 = vpop.f32.mrb[0].mxu0
      %v1426 = vadd.f32 0.0, %v1425
      %v1427 = vpop.f32.mrb[0].mxu0
      %v1428 = vadd.f32 0.0, %v1427
      %1429 = vdwg.mxu0
      %v1430 = vadd.f32 %v1332, %v1426
      %v1431 = vadd.f32 %v1333, %v1428
      %s1432 = scalar_lea.vmem %s2, 16
      %v1433 = vld [vmem:[%s1432] sm:$0xf]
      %v1435 = vsel %vm242, %v1433, 0
      %v1438 = vsel %vm246, %v1055, 0
      %v1441 = vsel %vm246, %v1056, 0
      %1443 = vmatprep.subr.mxu0 %v1441
      %1444 = vmatpush1.msra.mxu0 %v1438
      %1445 = vmatprep.subr.mxu0 0.0
      %1446 = vmatpush1.msra.mxu0 0.0
      %1447 = vmatprep.subr.mxu0 0.0
      %1448 = vmatpush1.msra.mxu0 0.0
      %1449 = vmatprep.subr.mxu0 0.0
      %1450 = vmatpush1.msra.mxu0 0.0
      %1451 = vmatprep.subr.mxu0 0.0
      %1452 = vmatpush1.msra.mxu0 0.0
      %1453 = vmatprep.subr.mxu0 0.0
      %1454 = vmatpush1.msra.mxu0 0.0
      %1455 = vmatprep.subr.mxu0 0.0
      %1456 = vmatpush1.msra.mxu0 0.0
      %1457 = vmatprep.subr.mxu0 0.0
      %1458 = vmatpush1.msra.mxu0 0.0
      %1459 = vmatprep.subr.mxu0 0.0
      %1460 = vmatpush1.msra.mxu0 0.0
      %1461 = vmatprep.subr.mxu0 0.0
      %1462 = vmatpush1.msra.mxu0 0.0
      %1463 = vmatprep.subr.mxu0 0.0
      %1464 = vmatpush1.msra.mxu0 0.0
      %1465 = vmatprep.subr.mxu0 0.0
      %1466 = vmatpush1.msra.mxu0 0.0
      %1467 = vmatprep.subr.mxu0 0.0
      %1468 = vmatpush1.msra.mxu0 0.0
      %1469 = vmatprep.subr.mxu0 0.0
      %1470 = vmatpush1.msra.mxu0 0.0
      %1471 = vmatprep.subr.mxu0 0.0
      %1472 = vmatpush1.msra.mxu0 0.0
      %1473 = vmatprep.subr.mxu0 0.0
      %1474 = vmatpush1.msra.mxu0 0.0
      %1475 = vmatprep.subr.mxu0 0.0
      %1476 = vmatpush1.msra.mxu0 0.0
      %1477 = vmatprep.subr.mxu0 0.0
      %1478 = vmatpush1.msra.mxu0 0.0
      %1479 = vmatprep.subr.mxu0 0.0
      %1480 = vmatpush1.msra.mxu0 0.0
      %1481 = vmatprep.subr.mxu0 0.0
      %1482 = vmatpush1.msra.mxu0 0.0
      %1483 = vmatprep.subr.mxu0 0.0
      %1484 = vmatpush1.msra.mxu0 0.0
      %1485 = vmatprep.subr.mxu0 0.0
      %1486 = vmatpush1.msra.mxu0 0.0
      %1487 = vmatprep.subr.mxu0 0.0
      %1488 = vmatpush1.msra.mxu0 0.0
      %1489 = vmatprep.subr.mxu0 0.0
      %1490 = vmatpush1.msra.mxu0 0.0
      %1491 = vmatprep.subr.mxu0 0.0
      %1492 = vmatpush1.msra.mxu0 0.0
      %1493 = vmatprep.subr.mxu0 0.0
      %1494 = vmatpush1.msra.mxu0 0.0
      %1495 = vmatprep.subr.mxu0 0.0
      %1496 = vmatpush1.msra.mxu0 0.0
      %1497 = vmatprep.subr.mxu0 0.0
      %1498 = vmatpush1.msra.mxu0 0.0
      %1499 = vmatprep.subr.mxu0 0.0
      %1500 = vmatpush1.msra.mxu0 0.0
      %1501 = vmatprep.subr.mxu0 0.0
      %1502 = vmatpush1.msra.mxu0 0.0
      %1503 = vmatprep.subr.mxu0 0.0
      %1504 = vmatpush1.msra.mxu0 0.0
      %1505 = vmatprep.subr.mxu0 0.0
      %1506 = vmatpush1.msra.mxu0 0.0
      %1507 = vmatprep.mubr.f32.mxu0 0.0
      %1508 = vmatmul.mubr.f32.gmra.mrb[0].mxu0 %v1435
      %v1509 = vpop.f32.mrb[0].mxu0
      %v1510 = vadd.f32 0.0, %v1509
      %v1511 = vpop.f32.mrb[0].mxu0
      %v1512 = vadd.f32 0.0, %v1511
      %1513 = vdwg.mxu0
      %v1514 = vadd.f32 %v1430, %v1510
      %v1515 = vadd.f32 %v1431, %v1512
      %v1516 = vsel %vm406, %v1345, %v1338
      %v1517 = vsel %vm407, %v1344, %v1339
      %s1518 = scalar_lea.vmem %s2, 28
      %v1519 = vld [vmem:[%s1518] sm:$0xf]
      %v1521 = vsel %vm242, %v1519, 0
      %v1524 = vsel %vm246, %v1516, 0
      %v1527 = vsel %vm246, %v1517, 0
      %1529 = vmatprep.subr.mxu0 %v1527
      %1530 = vmatpush1.msra.mxu0 %v1524
      %1531 = vmatprep.subr.mxu0 0.0
      %1532 = vmatpush1.msra.mxu0 0.0
      %1533 = vmatprep.subr.mxu0 0.0
      %1534 = vmatpush1.msra.mxu0 0.0
      %1535 = vmatprep.subr.mxu0 0.0
      %1536 = vmatpush1.msra.mxu0 0.0
      %1537 = vmatprep.subr.mxu0 0.0
      %1538 = vmatpush1.msra.mxu0 0.0
      %1539 = vmatprep.subr.mxu0 0.0
      %1540 = vmatpush1.msra.mxu0 0.0
      %1541 = vmatprep.subr.mxu0 0.0
      %1542 = vmatpush1.msra.mxu0 0.0
      %1543 = vmatprep.subr.mxu0 0.0
      %1544 = vmatpush1.msra.mxu0 0.0
      %1545 = vmatprep.subr.mxu0 0.0
      %1546 = vmatpush1.msra.mxu0 0.0
      %1547 = vmatprep.subr.mxu0 0.0
      %1548 = vmatpush1.msra.mxu0 0.0
      %1549 = vmatprep.subr.mxu0 0.0
      %1550 = vmatpush1.msra.mxu0 0.0
      %1551 = vmatprep.subr.mxu0 0.0
      %1552 = vmatpush1.msra.mxu0 0.0
      %1553 = vmatprep.subr.mxu0 0.0
      %1554 = vmatpush1.msra.mxu0 0.0
      %1555 = vmatprep.subr.mxu0 0.0
      %1556 = vmatpush1.msra.mxu0 0.0
      %1557 = vmatprep.subr.mxu0 0.0
      %1558 = vmatpush1.msra.mxu0 0.0
      %1559 = vmatprep.subr.mxu0 0.0
      %1560 = vmatpush1.msra.mxu0 0.0
      %1561 = vmatprep.subr.mxu0 0.0
      %1562 = vmatpush1.msra.mxu0 0.0
      %1563 = vmatprep.subr.mxu0 0.0
      %1564 = vmatpush1.msra.mxu0 0.0
      %1565 = vmatprep.subr.mxu0 0.0
      %1566 = vmatpush1.msra.mxu0 0.0
      %1567 = vmatprep.subr.mxu0 0.0
      %1568 = vmatpush1.msra.mxu0 0.0
      %1569 = vmatprep.subr.mxu0 0.0
      %1570 = vmatpush1.msra.mxu0 0.0
      %1571 = vmatprep.subr.mxu0 0.0
      %1572 = vmatpush1.msra.mxu0 0.0
      %1573 = vmatprep.subr.mxu0 0.0
      %1574 = vmatpush1.msra.mxu0 0.0
      %1575 = vmatprep.subr.mxu0 0.0
      %1576 = vmatpush1.msra.mxu0 0.0
      %1577 = vmatprep.subr.mxu0 0.0
      %1578 = vmatpush1.msra.mxu0 0.0
      %1579 = vmatprep.subr.mxu0 0.0
      %1580 = vmatpush1.msra.mxu0 0.0
      %1581 = vmatprep.subr.mxu0 0.0
      %1582 = vmatpush1.msra.mxu0 0.0
      %1583 = vmatprep.subr.mxu0 0.0
      %1584 = vmatpush1.msra.mxu0 0.0
      %1585 = vmatprep.subr.mxu0 0.0
      %1586 = vmatpush1.msra.mxu0 0.0
      %1587 = vmatprep.subr.mxu0 0.0
      %1588 = vmatpush1.msra.mxu0 0.0
      %1589 = vmatprep.subr.mxu0 0.0
      %1590 = vmatpush1.msra.mxu0 0.0
      %1591 = vmatprep.subr.mxu0 0.0
      %1592 = vmatpush1.msra.mxu0 0.0
      %1593 = vmatprep.mubr.f32.mxu0 0.0
      %1594 = vmatmul.mubr.f32.gmra.mrb[0].mxu0 %v1521
      %v1595 = vpop.f32.mrb[0].mxu0
      %v1596 = vadd.f32 0.0, %v1595
      %v1597 = vpop.f32.mrb[0].mxu0
      %v1598 = vadd.f32 0.0, %v1597
      %1599 = vdwg.mxu0
      %v1600 = vadd.f32 %v1514, %v1596
      %v1601 = vadd.f32 %v1515, %v1598
      %v1602 = vsel %vm762, %v1068, %v1061
      %v1603 = vsel %vm763, %v1067, %v1062
      %1604 = vrot.lane.b32.xlu0 %v1602, 112
      %v1605 = vpop.permute.xlu0 %1604
      %1606 = vrot.lane.b32.xlu0 %v1603, 112
      %v1607 = vpop.permute.xlu0 %1606
      %v1608 = vsel %vm224, %v1605, %v1607
      %v1609 = vsel %vm224, %v1607, %v1605
      %1610 = vrot.lane.b32.xlu0 %v1602, 16
      %v1611 = vpop.permute.xlu0 %1610
      %1612 = vrot.lane.b32.xlu0 %v1603, 16
      %v1613 = vpop.permute.xlu0 %1612
      %v1614 = vsel %vm192, %v1611, %v1613
      %v1615 = vsel %vm192, %v1613, %v1611
      %v1616 = vsel %vm235, %v1608, %v1615
      %v1617 = vsel %vm236, %v1609, %v1614
      %s1618 = scalar_lea.vmem %s2, 8
      %v1619 = vld [vmem:[%s1618] sm:$0xf]
      %v1621 = vsel %vm242, %v1619, 0
      %v1624 = vsel %vm246, %v1616, 0
      %v1627 = vsel %vm246, %v1617, 0
      %1629 = vmatprep.subr.mxu0 %v1627
      %1630 = vmatpush1.msra.mxu0 %v1624
      %1631 = vmatprep.subr.mxu0 0.0
      %1632 = vmatpush1.msra.mxu0 0.0
      %1633 = vmatprep.subr.mxu0 0.0
      %1634 = vmatpush1.msra.mxu0 0.0
      %1635 = vmatprep.subr.mxu0 0.0
      %1636 = vmatpush1.msra.mxu0 0.0
      %1637 = vmatprep.subr.mxu0 0.0
      %1638 = vmatpush1.msra.mxu0 0.0
      %1639 = vmatprep.subr.mxu0 0.0
      %1640 = vmatpush1.msra.mxu0 0.0
      %1641 = vmatprep.subr.mxu0 0.0
      %1642 = vmatpush1.msra.mxu0 0.0
      %1643 = vmatprep.subr.mxu0 0.0
      %1644 = vmatpush1.msra.mxu0 0.0
      %1645 = vmatprep.subr.mxu0 0.0
      %1646 = vmatpush1.msra.mxu0 0.0
      %1647 = vmatprep.subr.mxu0 0.0
      %1648 = vmatpush1.msra.mxu0 0.0
      %1649 = vmatprep.subr.mxu0 0.0
      %1650 = vmatpush1.msra.mxu0 0.0
      %1651 = vmatprep.subr.mxu0 0.0
      %1652 = vmatpush1.msra.mxu0 0.0
      %1653 = vmatprep.subr.mxu0 0.0
      %1654 = vmatpush1.msra.mxu0 0.0
      %1655 = vmatprep.subr.mxu0 0.0
      %1656 = vmatpush1.msra.mxu0 0.0
      %1657 = vmatprep.subr.mxu0 0.0
      %1658 = vmatpush1.msra.mxu0 0.0
      %1659 = vmatprep.subr.mxu0 0.0
      %1660 = vmatpush1.msra.mxu0 0.0
      %1661 = vmatprep.subr.mxu0 0.0
      %1662 = vmatpush1.msra.mxu0 0.0
      %1663 = vmatprep.subr.mxu0 0.0
      %1664 = vmatpush1.msra.mxu0 0.0
      %1665 = vmatprep.subr.mxu0 0.0
      %1666 = vmatpush1.msra.mxu0 0.0
      %1667 = vmatprep.subr.mxu0 0.0
      %1668 = vmatpush1.msra.mxu0 0.0
      %1669 = vmatprep.subr.mxu0 0.0
      %1670 = vmatpush1.msra.mxu0 0.0
      %1671 = vmatprep.subr.mxu0 0.0
      %1672 = vmatpush1.msra.mxu0 0.0
      %1673 = vmatprep.subr.mxu0 0.0
      %1674 = vmatpush1.msra.mxu0 0.0
      %1675 = vmatprep.subr.mxu0 0.0
      %1676 = vmatpush1.msra.mxu0 0.0
      %1677 = vmatprep.subr.mxu0 0.0
      %1678 = vmatpush1.msra.mxu0 0.0
      %1679 = vmatprep.subr.mxu0 0.0
      %1680 = vmatpush1.msra.mxu0 0.0
      %1681 = vmatprep.subr.mxu0 0.0
      %1682 = vmatpush1.msra.mxu0 0.0
      %1683 = vmatprep.subr.mxu0 0.0
      %1684 = vmatpush1.msra.mxu0 0.0
      %1685 = vmatprep.subr.mxu0 0.0
      %1686 = vmatpush1.msra.mxu0 0.0
      %1687 = vmatprep.subr.mxu0 0.0
      %1688 = vmatpush1.msra.mxu0 0.0
      %1689 = vmatprep.subr.mxu0 0.0
      %1690 = vmatpush1.msra.mxu0 0.0
      %1691 = vmatprep.subr.mxu0 0.0
      %1692 = vmatpush1.msra.mxu0 0.0
      %1693 = vmatprep.mubr.f32.mxu0 0.0
      %1694 = vmatmul.mubr.f32.gmra.mrb[0].mxu0 %v1621
      %v1695 = vpop.f32.mrb[0].mxu0
      %v1696 = vadd.f32 0.0, %v1695
      %v1697 = vpop.f32.mrb[0].mxu0
      %v1698 = vadd.f32 0.0, %v1697
      %1699 = vdwg.mxu0
      %v1700 = vadd.f32 %v1600, %v1696
      %v1701 = vadd.f32 %v1601, %v1698
      %s1702 = scalar_lea.vmem %s2, 20
      %v1703 = vld [vmem:[%s1702] sm:$0xf]
      %v1705 = vsel %vm242, %v1703, 0
      %v1708 = vsel %vm246, %v1602, 0
      %v1711 = vsel %vm246, %v1603, 0
      %1713 = vmatprep.subr.mxu0 %v1711
      %1714 = vmatpush1.msra.mxu0 %v1708
      %1715 = vmatprep.subr.mxu0 0.0
      %1716 = vmatpush1.msra.mxu0 0.0
      %1717 = vmatprep.subr.mxu0 0.0
      %1718 = vmatpush1.msra.mxu0 0.0
      %1719 = vmatprep.subr.mxu0 0.0
      %1720 = vmatpush1.msra.mxu0 0.0
      %1721 = vmatprep.subr.mxu0 0.0
      %1722 = vmatpush1.msra.mxu0 0.0
      %1723 = vmatprep.subr.mxu0 0.0
      %1724 = vmatpush1.msra.mxu0 0.0
      %1725 = vmatprep.subr.mxu0 0.0
      %1726 = vmatpush1.msra.mxu0 0.0
      %1727 = vmatprep.subr.mxu0 0.0
      %1728 = vmatpush1.msra.mxu0 0.0
      %1729 = vmatprep.subr.mxu0 0.0
      %1730 = vmatpush1.msra.mxu0 0.0
      %1731 = vmatprep.subr.mxu0 0.0
      %1732 = vmatpush1.msra.mxu0 0.0
      %1733 = vmatprep.subr.mxu0 0.0
      %1734 = vmatpush1.msra.mxu0 0.0
      %1735 = vmatprep.subr.mxu0 0.0
      %1736 = vmatpush1.msra.mxu0 0.0
      %1737 = vmatprep.subr.mxu0 0.0
      %1738 = vmatpush1.msra.mxu0 0.0
      %1739 = vmatprep.subr.mxu0 0.0
      %1740 = vmatpush1.msra.mxu0 0.0
      %1741 = vmatprep.subr.mxu0 0.0
      %1742 = vmatpush1.msra.mxu0 0.0
      %1743 = vmatprep.subr.mxu0 0.0
      %1744 = vmatpush1.msra.mxu0 0.0
      %1745 = vmatprep.subr.mxu0 0.0
      %1746 = vmatpush1.msra.mxu0 0.0
      %1747 = vmatprep.subr.mxu0 0.0
      %1748 = vmatpush1.msra.mxu0 0.0
      %1749 = vmatprep.subr.mxu0 0.0
      %1750 = vmatpush1.msra.mxu0 0.0
      %1751 = vmatprep.subr.mxu0 0.0
      %1752 = vmatpush1.msra.mxu0 0.0
      %1753 = vmatprep.subr.mxu0 0.0
      %1754 = vmatpush1.msra.mxu0 0.0
      %1755 = vmatprep.subr.mxu0 0.0
      %1756 = vmatpush1.msra.mxu0 0.0
      %1757 = vmatprep.subr.mxu0 0.0
      %1758 = vmatpush1.msra.mxu0 0.0
      %1759 = vmatprep.subr.mxu0 0.0
      %1760 = vmatpush1.msra.mxu0 0.0
      %1761 = vmatprep.subr.mxu0 0.0
      %1762 = vmatpush1.msra.mxu0 0.0
      %1763 = vmatprep.subr.mxu0 0.0
      %1764 = vmatpush1.msra.mxu0 0.0
      %1765 = vmatprep.subr.mxu0 0.0
      %1766 = vmatpush1.msra.mxu0 0.0
      %1767 = vmatprep.subr.mxu0 0.0
      %1768 = vmatpush1.msra.mxu0 0.0
      %1769 = vmatprep.subr.mxu0 0.0
      %1770 = vmatpush1.msra.mxu0 0.0
      %1771 = vmatprep.subr.mxu0 0.0
      %1772 = vmatpush1.msra.mxu0 0.0
      %1773 = vmatprep.subr.mxu0 0.0
      %1774 = vmatpush1.msra.mxu0 0.0
      %1775 = vmatprep.subr.mxu0 0.0
      %1776 = vmatpush1.msra.mxu0 0.0
      %1777 = vmatprep.mubr.f32.mxu0 0.0
      %1778 = vmatmul.mubr.f32.gmra.mrb[0].mxu0 %v1705
      %v1779 = vpop.f32.mrb[0].mxu0
      %v1780 = vadd.f32 0.0, %v1779
      %v1781 = vpop.f32.mrb[0].mxu0
      %v1782 = vadd.f32 0.0, %v1781
      %1783 = vdwg.mxu0
      %v1784 = vadd.f32 %v1700, %v1780
      %v1785 = vadd.f32 %v1701, %v1782
      %v1786 = vsel %vm406, %v1615, %v1608
      %v1787 = vsel %vm407, %v1614, %v1609
      %s1788 = scalar_lea.vmem %s2, 32
      %v1789 = vld [vmem:[%s1788] sm:$0xf]
      %v1791 = vsel %vm242, %v1789, 0
      %v1794 = vsel %vm246, %v1786, 0
      %v1797 = vsel %vm246, %v1787, 0
      %1799 = vmatprep.subr.mxu0 %v1797
      %1800 = vmatpush1.msra.mxu0 %v1794
      %1801 = vmatprep.subr.mxu0 0.0
      %1802 = vmatpush1.msra.mxu0 0.0
      %1803 = vmatprep.subr.mxu0 0.0
      %1804 = vmatpush1.msra.mxu0 0.0
      %1805 = vmatprep.subr.mxu0 0.0
      %1806 = vmatpush1.msra.mxu0 0.0
      %1807 = vmatprep.subr.mxu0 0.0
      %1808 = vmatpush1.msra.mxu0 0.0
      %1809 = vmatprep.subr.mxu0 0.0
      %1810 = vmatpush1.msra.mxu0 0.0
      %1811 = vmatprep.subr.mxu0 0.0
      %1812 = vmatpush1.msra.mxu0 0.0
      %1813 = vmatprep.subr.mxu0 0.0
      %1814 = vmatpush1.msra.mxu0 0.0
      %1815 = vmatprep.subr.mxu0 0.0
      %1816 = vmatpush1.msra.mxu0 0.0
      %1817 = vmatprep.subr.mxu0 0.0
      %1818 = vmatpush1.msra.mxu0 0.0
      %1819 = vmatprep.subr.mxu0 0.0
      %1820 = vmatpush1.msra.mxu0 0.0
      %1821 = vmatprep.subr.mxu0 0.0
      %1822 = vmatpush1.msra.mxu0 0.0
      %1823 = vmatprep.subr.mxu0 0.0
      %1824 = vmatpush1.msra.mxu0 0.0
      %1825 = vmatprep.subr.mxu0 0.0
      %1826 = vmatpush1.msra.mxu0 0.0
      %1827 = vmatprep.subr.mxu0 0.0
      %1828 = vmatpush1.msra.mxu0 0.0
      %1829 = vmatprep.subr.mxu0 0.0
      %1830 = vmatpush1.msra.mxu0 0.0
      %1831 = vmatprep.subr.mxu0 0.0
      %1832 = vmatpush1.msra.mxu0 0.0
      %1833 = vmatprep.subr.mxu0 0.0
      %1834 = vmatpush1.msra.mxu0 0.0
      %1835 = vmatprep.subr.mxu0 0.0
      %1836 = vmatpush1.msra.mxu0 0.0
      %1837 = vmatprep.subr.mxu0 0.0
      %1838 = vmatpush1.msra.mxu0 0.0
      %1839 = vmatprep.subr.mxu0 0.0
      %1840 = vmatpush1.msra.mxu0 0.0
      %1841 = vmatprep.subr.mxu0 0.0
      %1842 = vmatpush1.msra.mxu0 0.0
      %1843 = vmatprep.subr.mxu0 0.0
      %1844 = vmatpush1.msra.mxu0 0.0
      %1845 = vmatprep.subr.mxu0 0.0
      %1846 = vmatpush1.msra.mxu0 0.0
      %1847 = vmatprep.subr.mxu0 0.0
      %1848 = vmatpush1.msra.mxu0 0.0
      %1849 = vmatprep.subr.mxu0 0.0
      %1850 = vmatpush1.msra.mxu0 0.0
      %1851 = vmatprep.subr.mxu0 0.0
      %1852 = vmatpush1.msra.mxu0 0.0
      %1853 = vmatprep.subr.mxu0 0.0
      %1854 = vmatpush1.msra.mxu0 0.0
      %1855 = vmatprep.subr.mxu0 0.0
      %1856 = vmatpush1.msra.mxu0 0.0
      %1857 = vmatprep.subr.mxu0 0.0
      %1858 = vmatpush1.msra.mxu0 0.0
      %1859 = vmatprep.subr.mxu0 0.0
      %1860 = vmatpush1.msra.mxu0 0.0
      %1861 = vmatprep.subr.mxu0 0.0
      %1862 = vmatpush1.msra.mxu0 0.0
      %1863 = vmatprep.mubr.f32.mxu0 0.0
      %1864 = vmatmul.mubr.f32.gmra.mrb[0].mxu0 %v1791
      %v1865 = vpop.f32.mrb[0].mxu0
      %v1866 = vadd.f32 0.0, %v1865
      %v1867 = vpop.f32.mrb[0].mxu0
      %v1868 = vadd.f32 0.0, %v1867
      %1869 = vdwg.mxu0
      %v1870 = vadd.f32 %v1784, %v1866
      %v1871 = vadd.f32 %v1785, %v1868
      %v1872 = vsel %vm246, %v1870, 0.0
      %v1873 = vsel %vm246, %v1871, 0.0
      %v1874 = vadd.f32 %v1872, %v1873
      %1875 = vadd.xlane.f32.xlu0 %v1874
      %v1876 = vpop.xlane.xlu0 %1875
      %v1877 = vmul.f32 %v1876, %v1039
      %v1878 = vsub.f32 %v1870, %v1877
      %v1879 = vsub.f32 %v1871, %v1877
      %v1880 = vmul.f32 %v1878, %v1878
      %v1881 = vmul.f32 %v1879, %v1879
      %v1882 = vsel %vm246, %v1880, 0.0
      %v1883 = vsel %vm246, %v1881, 0.0
      %v1884 = vadd.f32 %v1882, %v1883
      %1885 = vadd.xlane.f32.xlu0 %v1884
      %v1886 = vpop.xlane.xlu0 %1885
      %v1887 = vmul.f32 %v1886, %v1039
      %v1888 = vadd.f32 %v1887, 1e-05
      %v1889 = vrsqrt.pop %v1888
      %v1890 = vmul.f32 %v1878, %v1889
      %v1891 = vmul.f32 %v1879, %v1889
      %v1894 = vcombine.low %v1890, %v1891
      %v1896 = vadd.f32 %v196, %v1894
      %1897 = vst [vmem:[%s170] sm:$0xff] %v1896
      %p1898 = scmp.lt.s32.totalorder %s14, 1
      %s1899 = scalar_select %p1898, %s14, 1
      %s1900 = smul.addr %s1899, 2
      %s1901 = smul.addr %s1900, 4
      %s1902 = scalar_lea.vmem %s3, %s1901
      // Predicated region
      $region33: #{resnet_block.1} parent=31 // pred_check
        %p1903 = pneg %p100
      $region34: #{resnet_block.1} parent=31 // pred_check_branch
        %1905 = sbr.rel (%p1903) target = $region36
      $region35: #{resnet_block.1} parent=31 // pred_region
        _
      $region36: #{resnet_block.1} parent=31 // pred_fallthru
        _
    $region32: #{resnet_block.1} parent=5 // pred_fallthru
      _
    %p1906 = scmp.le.s32.totalorder 2, %s9
    // Predicated region
    $region37: #{resnet_block.1} parent=5 // pred_check
      %p1907 = pneg %p1906
    $region38: #{resnet_block.1} parent=5 // pred_check_branch
      %1909 = sbr.rel (%p1907) target = $region40
    $region39: #{resnet_block.1} parent=5 // pred_region
      %s1910 = ssub.s32 %s9, 2
      // Predicated region
      $region41: #{resnet_block.1} parent=39 // pred_check
        %p1911 = pneg %p106
      $region42: #{resnet_block.1} parent=39 // pred_check_branch
        %1913 = sbr.rel (%p1911) target = $region44
      $region43: #{resnet_block.1} parent=39 // pred_region
        %p1914 = scmp.lt.s32.totalorder %s15, 1
        %s1915 = scalar_select %p1914, %s15, 1
        %s1916 = smul.addr %s1915, 2
        %s1917 = smul.addr %s1916, 4
        %s1918 = scalar_lea.vmem %s3, %s1917
      $region44: #{resnet_block.1} parent=39 // pred_fallthru
        _
    $region40: #{resnet_block.1} parent=5 // pred_fallthru
      _
  $region6: #{resnet_block.1} parent=0 // loop_footer
    %s13 = sadd.s32 1, %s9
  $region7: #{resnet_block.1} parent=0 // loop_footer_branch
    %8 = sbr.rel target = $region3
  $region8: #{resnet_block.1} parent=0 // loop_exit
    _

</llo_original>
